<compile_context>
chip_gen: v5e
topology: v5e:2x2
jax: 0.10.0
libtpu: 0.0.40
codegen_flags: <defaults>
</compile_context>

<pallas_src>
import math

import jax
import jax.numpy as jnp
from jax.experimental import pallas as pl
from jax.experimental.pallas import tpu as pltpu


HIDDEN = 256
STREAM = 128


def qnetwork_kernel(x_ref,
                    w0, b0, w1, b1, w2, b2,
                    w3, b3,            # fused fc3: cols [:128] value stream, [128:] advantage
                    w4s, b4s,          # (128, N), (1, N)
                    w4a, b4a,          # (128, OUT_PAD), (1, OUT_PAD) zero past A*N
                    avg_m,             # (OUT_PAD, N): avg_m[a*N+n, n] = 1/A
                    tile_m,            # (N, OUT_PAD): tile_m[n, a*N+n] = 1
                    out_ref):
    """One batch tile of the full QNetwork forward, entirely in VMEM."""

    def linear(h, w_ref, b_ref):
        # bf16 operands -> single-pass MXU matmul, f32 accumulation, f32 bias.
        return jnp.dot(h.astype(jnp.bfloat16), w_ref[...],
                       preferred_element_type=jnp.float32) + b_ref[...]

    def linear_relu(h, w_ref, b_ref):
        return jnp.maximum(linear(h, w_ref, b_ref), 0.0)

    x = x_ref[...]
    h = linear_relu(x, w0, b0)          # (TB, 256)
    h = linear_relu(h, w1, b1)          # (TB, 256)
    h = linear_relu(h, w2, b2)          # (TB, 256)

    # Fused value/advantage fc3: one 256->256 matmul, then 128-aligned slices.
    h3 = linear_relu(h, w3, b3)         # (TB, 256)
    hs = h3[:, :STREAM]                 # value stream
    ha = h3[:, STREAM:]                 # advantage stream

    sv = linear(hs, w4s, b4s)           # (TB, N)        f32
    adv = linear(ha, w4a, b4a)          # (TB, OUT_PAD)  f32 (zeros past A*N)

    # Vectorized dueling combine (no per-action loops, no masked stores):
    #   mean_adv[b, n] = (1/A) * sum_a adv[b, a*N + n]
    #   out[b, a*N+n]  = adv[b, a*N+n] + (sv[b, n] - mean_adv[b, n])
    mean_adv = jnp.dot(adv, avg_m[...], preferred_element_type=jnp.float32)
    tiled = jnp.dot(sv - mean_adv, tile_m[...], preferred_element_type=jnp.float32)

    out_ref[...] = adv + tiled          # single unmasked 128-lane-wide store


def _init_linear(key, fan_in, fan_out):
    """nn.Linear-style init U(-1/sqrt(fan_in), 1/sqrt(fan_in)); W is (in, out)."""
    kw, kb = jax.random.split(key)
    bound = 1.0 / math.sqrt(fan_in)
    w = jax.random.uniform(kw, (fan_in, fan_out), jnp.float32,
                           minval=-bound, maxval=bound)
    b = jax.random.uniform(kb, (1, fan_out), jnp.float32,
                           minval=-bound, maxval=bound)
    return w, b


def make_qnetwork_params(key, state_size, action_size, n_atoms):
    ks = jax.random.split(key, 7)
    p = {}
    p["w0"], p["b0"] = _init_linear(ks[0], state_size, HIDDEN)
    p["w1"], p["b1"] = _init_linear(ks[1], HIDDEN, HIDDEN)
    p["w2"], p["b2"] = _init_linear(ks[2], HIDDEN, HIDDEN)
    p["w3s"], p["b3s"] = _init_linear(ks[3], HIDDEN, STREAM)
    p["w3a"], p["b3a"] = _init_linear(ks[4], HIDDEN, STREAM)
    p["w4s"], p["b4s"] = _init_linear(ks[5], STREAM, n_atoms)
    p["w4a"], p["b4a"] = _init_linear(ks[6], STREAM, action_size * n_atoms)
    return p


def make_kernel_params(p, action_size, n_atoms, out_pad):
    """Fuse fc3, zero-pad fc4_a to out_pad lanes, cast weights to bf16, and
    build the constant averaging/tiling matrices for the dueling combine."""
    an = action_size * n_atoms
    bf = lambda w: w.astype(jnp.bfloat16)

    w3 = jnp.concatenate([p["w3s"], p["w3a"]], axis=1)          # (256, 256)
    b3 = jnp.concatenate([p["b3s"], p["b3a"]], axis=1)          # (1, 256)

    w4a = jnp.pad(p["w4a"], ((0, 0), (0, out_pad - an)))        # (128, out_pad)
    b4a = jnp.pad(p["b4a"], ((0, 0), (0, out_pad - an)))        # (1, out_pad)

    rows = jnp.arange(out_pad)
    cols = jnp.arange(n_atoms)
    valid = rows < an
    same_atom = (rows[:, None] % n_atoms) == cols[None, :]
    avg_m = jnp.where(same_atom & valid[:, None],
                      1.0 / action_size, 0.0).astype(jnp.float32)   # (out_pad, N)
    tile_m = jnp.where(same_atom.T & valid[None, :],
                       1.0, 0.0).astype(jnp.float32)                # (N, out_pad)

    return (bf(p["w0"]), p["b0"], bf(p["w1"]), p["b1"], bf(p["w2"]), p["b2"],
            bf(w3), b3, bf(p["w4s"]), p["b4s"], bf(w4a), b4a, avg_m, tile_m)


def qnetwork_forward(state, kernel_params, *, action_size, n_atoms, tile_b=128):
    B, S = state.shape
    an = action_size * n_atoms
    out_pad = max(128, pl.cdiv(an, 128) * 128)

    # Pad the batch up to a multiple of the tile; padded rows are sliced off.
    b_pad = pl.cdiv(B, tile_b) * tile_b
    if b_pad != B:
        state = jnp.pad(state, ((0, b_pad - B), (0, 0)))

    x_spec = pl.BlockSpec((tile_b, S), lambda i: (i, 0))
    # Weights / constants: full-array blocks with a constant index_map so they
    # stay VMEM-resident across batch grid steps (no re-DMA).
    const_spec = lambda arr: pl.BlockSpec(arr.shape, lambda i: (0,) * arr.ndim)
    out_spec = pl.BlockSpec((tile_b, out_pad), lambda i: (i, 0))

    out_padded = pl.pallas_call(
        qnetwork_kernel,
        out_shape=jax.ShapeDtypeStruct((b_pad, out_pad), jnp.float32),
        grid=(b_pad // tile_b,),
        in_specs=[x_spec] + [const_spec(a) for a in kernel_params],
        out_specs=out_spec,
        compiler_params=pltpu.CompilerParams(
            dimension_semantics=("parallel",),          # shard batch over TCs (v7x)
            vmem_limit_bytes=32 * 1024 * 1024,
        ),
    )(state, *kernel_params)

    # Lane-dense padded slab -> slice + reshape (matches PyTorch .view()).
    return out_padded[:B, :an].reshape(B, action_size, n_atoms)


def qnetwork_reference(state, p, *, action_size, n_atoms):
    """Pure-JAX reference mirroring the kernel's bf16-weight / f32-accum numerics."""
    bf = lambda a: a.astype(jnp.bfloat16)
    lin = lambda h, w, b: jnp.dot(bf(h), bf(w), preferred_element_type=jnp.float32) + b
    relu = lambda v: jnp.maximum(v, 0.0)

    h = relu(lin(state, p["w0"], p["b0"]))
    h = relu(lin(h, p["w1"], p["b1"]))
    h = relu(lin(h, p["w2"], p["b2"]))
    sv = lin(relu(lin(h, p["w3s"], p["b3s"])), p["w4s"], p["b4s"])      # (B, N)
    adv = lin(relu(lin(h, p["w3a"], p["b3a"])), p["w4a"], p["b4a"])     # (B, A*N)
    adv = adv.reshape(state.shape[0], action_size, n_atoms)
    return sv[:, None, :] + adv - adv.mean(axis=-2, keepdims=True)


if __name__ == "__main__":
    STATE_SIZE = 16
    ACTION_SIZE = 4
    N_ATOMS = 8
    BATCH = 4

    key = jax.random.PRNGKey(0)
    k_params, k_state = jax.random.split(key)

    params = make_qnetwork_params(k_params, STATE_SIZE, ACTION_SIZE, N_ATOMS)
    out_pad = max(128, pl.cdiv(ACTION_SIZE * N_ATOMS, 128) * 128)
    kparams = make_kernel_params(params, ACTION_SIZE, N_ATOMS, out_pad)

    state = jax.random.normal(k_state, (BATCH, STATE_SIZE), jnp.float32)

    dist = qnetwork_forward(state, kparams, action_size=ACTION_SIZE, n_atoms=N_ATOMS)
    dist = jax.block_until_ready(dist)

    ref = qnetwork_reference(state, params, action_size=ACTION_SIZE, n_atoms=N_ATOMS)
    assert dist.shape == (BATCH, ACTION_SIZE, N_ATOMS)
    assert jnp.allclose(dist, ref, atol=5e-3, rtol=5e-3), "mismatch vs reference"

    print("KERNEL_OK")
</pallas_src>

<mosaic_0001>
module attributes {stable_mosaic.version = 11 : i64} {
  func.func @qnetwork_kernel(%arg0: i32, %arg1: memref<128x16xf32, #tpu.memory_space<vmem>>, %arg2: memref<16x256xbf16, #tpu.memory_space<vmem>>, %arg3: memref<1x256xf32, #tpu.memory_space<vmem>>, %arg4: memref<256x256xbf16, #tpu.memory_space<vmem>>, %arg5: memref<1x256xf32, #tpu.memory_space<vmem>>, %arg6: memref<256x256xbf16, #tpu.memory_space<vmem>>, %arg7: memref<1x256xf32, #tpu.memory_space<vmem>>, %arg8: memref<256x256xbf16, #tpu.memory_space<vmem>>, %arg9: memref<1x256xf32, #tpu.memory_space<vmem>>, %arg10: memref<128x8xbf16, #tpu.memory_space<vmem>>, %arg11: memref<1x8xf32, #tpu.memory_space<vmem>>, %arg12: memref<128x128xbf16, #tpu.memory_space<vmem>>, %arg13: memref<1x128xf32, #tpu.memory_space<vmem>>, %arg14: memref<128x8xf32, #tpu.memory_space<vmem>>, %arg15: memref<8x128xf32, #tpu.memory_space<vmem>>, %arg16: memref<128x128xf32, #tpu.memory_space<vmem>>) attributes {dimension_semantics = [#tpu.dimension_semantics<parallel>], iteration_bounds = array<i64: 1>, scalar_prefetch = 0 : i64, scratch_operands = 0 : i64, tpu.core_type = #tpu.core_type<tc>, window_params = [{transform_indices = @transform_0, window_bounds = array<i64: 128, 16>}, {pipeline_mode = #tpu.pipeline_mode<synchronous>, transform_indices = @transform_1, window_bounds = array<i64: 16, 256>}, {pipeline_mode = #tpu.pipeline_mode<synchronous>, transform_indices = @transform_2, window_bounds = array<i64: 1, 256>}, {pipeline_mode = #tpu.pipeline_mode<synchronous>, transform_indices = @transform_3, window_bounds = array<i64: 256, 256>}, {pipeline_mode = #tpu.pipeline_mode<synchronous>, transform_indices = @transform_4, window_bounds = array<i64: 1, 256>}, {pipeline_mode = #tpu.pipeline_mode<synchronous>, transform_indices = @transform_5, window_bounds = array<i64: 256, 256>}, {pipeline_mode = #tpu.pipeline_mode<synchronous>, transform_indices = @transform_6, window_bounds = array<i64: 1, 256>}, {pipeline_mode = #tpu.pipeline_mode<synchronous>, transform_indices = @transform_7, window_bounds = array<i64: 256, 256>}, {pipeline_mode = #tpu.pipeline_mode<synchronous>, transform_indices = @transform_8, window_bounds = array<i64: 1, 256>}, {pipeline_mode = #tpu.pipeline_mode<synchronous>, transform_indices = @transform_9, window_bounds = array<i64: 128, 8>}, {pipeline_mode = #tpu.pipeline_mode<synchronous>, transform_indices = @transform_10, window_bounds = array<i64: 1, 8>}, {pipeline_mode = #tpu.pipeline_mode<synchronous>, transform_indices = @transform_11, window_bounds = array<i64: 128, 128>}, {pipeline_mode = #tpu.pipeline_mode<synchronous>, transform_indices = @transform_12, window_bounds = array<i64: 1, 128>}, {pipeline_mode = #tpu.pipeline_mode<synchronous>, transform_indices = @transform_13, window_bounds = array<i64: 128, 8>}, {pipeline_mode = #tpu.pipeline_mode<synchronous>, transform_indices = @transform_14, window_bounds = array<i64: 8, 128>}, {transform_indices = @transform_15, window_bounds = array<i64: 128, 128>}]} {
    %c0 = arith.constant 0 : index
    %c0_0 = arith.constant 0 : index
    %0 = vector.load %arg1[%c0, %c0_0] : memref<128x16xf32, #tpu.memory_space<vmem>>, vector<128x16xf32>
    %1 = arith.truncf %0 : vector<128x16xf32> to vector<128x16xbf16>
    %c0_1 = arith.constant 0 : index
    %c0_2 = arith.constant 0 : index
    %2 = vector.load %arg2[%c0_1, %c0_2] : memref<16x256xbf16, #tpu.memory_space<vmem>>, vector<16x256xbf16>
    %cst = arith.constant dense<0.000000e+00> : vector<128x256xf32>
    %3 = tpu.matmul %1, %2, %cst {dimension_numbers = #tpu.dot_dimension_numbers<[1], [0], [0], [1], [0, 0, 1, 1], [], []>} : vector<128x16xbf16>, vector<16x256xbf16>, vector<128x256xf32> -> vector<128x256xf32>
    %c0_3 = arith.constant 0 : index
    %c0_4 = arith.constant 0 : index
    %4 = vector.load %arg3[%c0_3, %c0_4] : memref<1x256xf32, #tpu.memory_space<vmem>>, vector<1x256xf32>
    %5 = vector.broadcast %4 : vector<1x256xf32> to vector<128x256xf32>
    %6 = arith.addf %3, %5 : vector<128x256xf32>
    %cst_5 = arith.constant 0.000000e+00 : f32
    %7 = vector.broadcast %cst_5 : f32 to vector<128x256xf32>
    %8 = arith.maximumf %6, %7 : vector<128x256xf32>
    %9 = arith.truncf %8 : vector<128x256xf32> to vector<128x256xbf16>
    %c0_6 = arith.constant 0 : index
    %c0_7 = arith.constant 0 : index
    %10 = vector.load %arg4[%c0_6, %c0_7] : memref<256x256xbf16, #tpu.memory_space<vmem>>, vector<256x256xbf16>
    %cst_8 = arith.constant dense<0.000000e+00> : vector<128x256xf32>
    %11 = tpu.matmul %9, %10, %cst_8 {dimension_numbers = #tpu.dot_dimension_numbers<[1], [0], [0], [1], [0, 0, 1, 1], [], []>} : vector<128x256xbf16>, vector<256x256xbf16>, vector<128x256xf32> -> vector<128x256xf32>
    %c0_9 = arith.constant 0 : index
    %c0_10 = arith.constant 0 : index
    %12 = vector.load %arg5[%c0_9, %c0_10] : memref<1x256xf32, #tpu.memory_space<vmem>>, vector<1x256xf32>
    %13 = vector.broadcast %12 : vector<1x256xf32> to vector<128x256xf32>
    %14 = arith.addf %11, %13 : vector<128x256xf32>
    %cst_11 = arith.constant 0.000000e+00 : f32
    %15 = vector.broadcast %cst_11 : f32 to vector<128x256xf32>
    %16 = arith.maximumf %14, %15 : vector<128x256xf32>
    %17 = arith.truncf %16 : vector<128x256xf32> to vector<128x256xbf16>
    %c0_12 = arith.constant 0 : index
    %c0_13 = arith.constant 0 : index
    %18 = vector.load %arg6[%c0_12, %c0_13] : memref<256x256xbf16, #tpu.memory_space<vmem>>, vector<256x256xbf16>
    %cst_14 = arith.constant dense<0.000000e+00> : vector<128x256xf32>
    %19 = tpu.matmul %17, %18, %cst_14 {dimension_numbers = #tpu.dot_dimension_numbers<[1], [0], [0], [1], [0, 0, 1, 1], [], []>} : vector<128x256xbf16>, vector<256x256xbf16>, vector<128x256xf32> -> vector<128x256xf32>
    %c0_15 = arith.constant 0 : index
    %c0_16 = arith.constant 0 : index
    %20 = vector.load %arg7[%c0_15, %c0_16] : memref<1x256xf32, #tpu.memory_space<vmem>>, vector<1x256xf32>
    %21 = vector.broadcast %20 : vector<1x256xf32> to vector<128x256xf32>
    %22 = arith.addf %19, %21 : vector<128x256xf32>
    %cst_17 = arith.constant 0.000000e+00 : f32
    %23 = vector.broadcast %cst_17 : f32 to vector<128x256xf32>
    %24 = arith.maximumf %22, %23 : vector<128x256xf32>
    %25 = arith.truncf %24 : vector<128x256xf32> to vector<128x256xbf16>
    %c0_18 = arith.constant 0 : index
    %c0_19 = arith.constant 0 : index
    %26 = vector.load %arg8[%c0_18, %c0_19] : memref<256x256xbf16, #tpu.memory_space<vmem>>, vector<256x256xbf16>
    %cst_20 = arith.constant dense<0.000000e+00> : vector<128x256xf32>
    %27 = tpu.matmul %25, %26, %cst_20 {dimension_numbers = #tpu.dot_dimension_numbers<[1], [0], [0], [1], [0, 0, 1, 1], [], []>} : vector<128x256xbf16>, vector<256x256xbf16>, vector<128x256xf32> -> vector<128x256xf32>
    %c0_21 = arith.constant 0 : index
    %c0_22 = arith.constant 0 : index
    %28 = vector.load %arg9[%c0_21, %c0_22] : memref<1x256xf32, #tpu.memory_space<vmem>>, vector<1x256xf32>
    %29 = vector.broadcast %28 : vector<1x256xf32> to vector<128x256xf32>
    %30 = arith.addf %27, %29 : vector<128x256xf32>
    %cst_23 = arith.constant 0.000000e+00 : f32
    %31 = vector.broadcast %cst_23 : f32 to vector<128x256xf32>
    %32 = arith.maximumf %30, %31 : vector<128x256xf32>
    %33 = vector.extract_strided_slice %32 {offsets = [0, 0], sizes = [128, 128], strides = [1, 1]} : vector<128x256xf32> to vector<128x128xf32>
    %34 = vector.extract_strided_slice %32 {offsets = [0, 128], sizes = [128, 128], strides = [1, 1]} : vector<128x256xf32> to vector<128x128xf32>
    %35 = arith.truncf %33 : vector<128x128xf32> to vector<128x128xbf16>
    %c0_24 = arith.constant 0 : index
    %c0_25 = arith.constant 0 : index
    %36 = vector.load %arg10[%c0_24, %c0_25] : memref<128x8xbf16, #tpu.memory_space<vmem>>, vector<128x8xbf16>
    %cst_26 = arith.constant dense<0.000000e+00> : vector<128x8xf32>
    %37 = tpu.matmul %35, %36, %cst_26 {dimension_numbers = #tpu.dot_dimension_numbers<[1], [0], [0], [1], [0, 0, 1, 1], [], []>} : vector<128x128xbf16>, vector<128x8xbf16>, vector<128x8xf32> -> vector<128x8xf32>
    %c0_27 = arith.constant 0 : index
    %c0_28 = arith.constant 0 : index
    %38 = vector.load %arg11[%c0_27, %c0_28] : memref<1x8xf32, #tpu.memory_space<vmem>>, vector<1x8xf32>
    %39 = vector.broadcast %38 : vector<1x8xf32> to vector<128x8xf32>
    %40 = arith.addf %37, %39 : vector<128x8xf32>
    %41 = arith.truncf %34 : vector<128x128xf32> to vector<128x128xbf16>
    %c0_29 = arith.constant 0 : index
    %c0_30 = arith.constant 0 : index
    %42 = vector.load %arg12[%c0_29, %c0_30] : memref<128x128xbf16, #tpu.memory_space<vmem>>, vector<128x128xbf16>
    %cst_31 = arith.constant dense<0.000000e+00> : vector<128x128xf32>
    %43 = tpu.matmul %41, %42, %cst_31 {dimension_numbers = #tpu.dot_dimension_numbers<[1], [0], [0], [1], [0, 0, 1, 1], [], []>} : vector<128x128xbf16>, vector<128x128xbf16>, vector<128x128xf32> -> vector<128x128xf32>
    %c0_32 = arith.constant 0 : index
    %c0_33 = arith.constant 0 : index
    %44 = vector.load %arg13[%c0_32, %c0_33] : memref<1x128xf32, #tpu.memory_space<vmem>>, vector<1x128xf32>
    %45 = vector.broadcast %44 : vector<1x128xf32> to vector<128x128xf32>
    %46 = arith.addf %43, %45 : vector<128x128xf32>
    %c0_34 = arith.constant 0 : index
    %c0_35 = arith.constant 0 : index
    %47 = vector.load %arg14[%c0_34, %c0_35] : memref<128x8xf32, #tpu.memory_space<vmem>>, vector<128x8xf32>
    %cst_36 = arith.constant dense<0.000000e+00> : vector<128x8xf32>
    %48 = tpu.matmul %46, %47, %cst_36 {dimension_numbers = #tpu.dot_dimension_numbers<[1], [0], [0], [1], [0, 0, 1, 1], [], []>} : vector<128x128xf32>, vector<128x8xf32>, vector<128x8xf32> -> vector<128x8xf32>
    %49 = arith.subf %40, %48 : vector<128x8xf32>
    %c0_37 = arith.constant 0 : index
    %c0_38 = arith.constant 0 : index
    %50 = vector.load %arg15[%c0_37, %c0_38] : memref<8x128xf32, #tpu.memory_space<vmem>>, vector<8x128xf32>
    %cst_39 = arith.constant dense<0.000000e+00> : vector<128x128xf32>
    %51 = tpu.matmul %49, %50, %cst_39 {dimension_numbers = #tpu.dot_dimension_numbers<[1], [0], [0], [1], [0, 0, 1, 1], [], []>} : vector<128x8xf32>, vector<8x128xf32>, vector<128x128xf32> -> vector<128x128xf32>
    %52 = arith.addf %46, %51 : vector<128x128xf32>
    %c0_40 = arith.constant 0 : index
    %c0_41 = arith.constant 0 : index
    %53 = vector.load %arg16[%c0_40, %c0_41] : memref<128x128xf32, #tpu.memory_space<vmem>>, vector<128x128xf32>
    tpu.vector_store %arg16[%c0_40, %c0_41], %52 {strides = array<i32>} : memref<128x128xf32, #tpu.memory_space<vmem>>, vector<128x128xf32>,
    return
  }
  func.func @transform_0(%arg0: i32) -> (i32, i32) {
    %c0_i32 = arith.constant 0 : i32
    %c0_i32_0 = arith.constant 0 : i32
    return %arg0, %c0_i32 : i32, i32
  }
  func.func @transform_1(%arg0: i32) -> (i32, i32) {
    %c0_i32 = arith.constant 0 : i32
    %c0_i32_0 = arith.constant 0 : i32
    %c0_i32_1 = arith.constant 0 : i32
    return %c0_i32, %c0_i32_0 : i32, i32
  }
  func.func @transform_2(%arg0: i32) -> (i32, i32) {
    %c0_i32 = arith.constant 0 : i32
    %c0_i32_0 = arith.constant 0 : i32
    %c0_i32_1 = arith.constant 0 : i32
    return %c0_i32, %c0_i32_0 : i32, i32
  }
  func.func @transform_3(%arg0: i32) -> (i32, i32) {
    %c0_i32 = arith.constant 0 : i32
    %c0_i32_0 = arith.constant 0 : i32
    %c0_i32_1 = arith.constant 0 : i32
    return %c0_i32, %c0_i32_0 : i32, i32
  }
  func.func @transform_4(%arg0: i32) -> (i32, i32) {
    %c0_i32 = arith.constant 0 : i32
    %c0_i32_0 = arith.constant 0 : i32
    %c0_i32_1 = arith.constant 0 : i32
    return %c0_i32, %c0_i32_0 : i32, i32
  }
  func.func @transform_5(%arg0: i32) -> (i32, i32) {
    %c0_i32 = arith.constant 0 : i32
    %c0_i32_0 = arith.constant 0 : i32
    %c0_i32_1 = arith.constant 0 : i32
    return %c0_i32, %c0_i32_0 : i32, i32
  }
  func.func @transform_6(%arg0: i32) -> (i32, i32) {
    %c0_i32 = arith.constant 0 : i32
    %c0_i32_0 = arith.constant 0 : i32
    %c0_i32_1 = arith.constant 0 : i32
    return %c0_i32, %c0_i32_0 : i32, i32
  }
  func.func @transform_7(%arg0: i32) -> (i32, i32) {
    %c0_i32 = arith.constant 0 : i32
    %c0_i32_0 = arith.constant 0 : i32
    %c0_i32_1 = arith.constant 0 : i32
    return %c0_i32, %c0_i32_0 : i32, i32
  }
  func.func @transform_8(%arg0: i32) -> (i32, i32) {
    %c0_i32 = arith.constant 0 : i32
    %c0_i32_0 = arith.constant 0 : i32
    %c0_i32_1 = arith.constant 0 : i32
    return %c0_i32, %c0_i32_0 : i32, i32
  }
  func.func @transform_9(%arg0: i32) -> (i32, i32) {
    %c0_i32 = arith.constant 0 : i32
    %c0_i32_0 = arith.constant 0 : i32
    %c0_i32_1 = arith.constant 0 : i32
    return %c0_i32, %c0_i32_0 : i32, i32
  }
  func.func @transform_10(%arg0: i32) -> (i32, i32) {
    %c0_i32 = arith.constant 0 : i32
    %c0_i32_0 = arith.constant 0 : i32
    %c0_i32_1 = arith.constant 0 : i32
    return %c0_i32, %c0_i32_0 : i32, i32
  }
  func.func @transform_11(%arg0: i32) -> (i32, i32) {
    %c0_i32 = arith.constant 0 : i32
    %c0_i32_0 = arith.constant 0 : i32
    %c0_i32_1 = arith.constant 0 : i32
    return %c0_i32, %c0_i32_0 : i32, i32
  }
  func.func @transform_12(%arg0: i32) -> (i32, i32) {
    %c0_i32 = arith.constant 0 : i32
    %c0_i32_0 = arith.constant 0 : i32
    %c0_i32_1 = arith.constant 0 : i32
    return %c0_i32, %c0_i32_0 : i32, i32
  }
  func.func @transform_13(%arg0: i32) -> (i32, i32) {
    %c0_i32 = arith.constant 0 : i32
    %c0_i32_0 = arith.constant 0 : i32
    %c0_i32_1 = arith.constant 0 : i32
    return %c0_i32, %c0_i32_0 : i32, i32
  }
  func.func @transform_14(%arg0: i32) -> (i32, i32) {
    %c0_i32 = arith.constant 0 : i32
    %c0_i32_0 = arith.constant 0 : i32
    %c0_i32_1 = arith.constant 0 : i32
    return %c0_i32, %c0_i32_0 : i32, i32
  }
  func.func @transform_15(%arg0: i32) -> (i32, i32) {
    %c0_i32 = arith.constant 0 : i32
    %c0_i32_0 = arith.constant 0 : i32
    return %arg0, %c0_i32 : i32, i32
  }
}

</mosaic_0001>

<llo_original>
// kernel: tpu_custom_call.1
$region0: #{tpu_custom_call.1}
  #allocation0 [shape = 'u32[]', space=smem, size = 0x4, offset = 0x4, fixed_abs, tag = 'smem constant byte address 0x4 - core index']
  #allocation1 [shape = 'u32[72,128]{1,0:T(1,128)}', space=vmem, size = 0x9000, scoped, tag = 'internal scratch']
  %s0 = inlined_call_operand.vmem [shape: f32[128,16], index: 0, kind: input, shape index: {}]
  %s1 = inlined_call_operand.hbm [shape: bf16[16,256], index: 1, kind: input, shape index: {}]
  %s2 = inlined_call_operand.vmem [shape: f32[1,256], index: 2, kind: input, shape index: {}]
  %s3 = inlined_call_operand.vmem [shape: bf16[256,256], index: 3, kind: input, shape index: {}]
  %s4 = inlined_call_operand.vmem [shape: f32[1,256], index: 4, kind: input, shape index: {}]
  %s5 = inlined_call_operand.hbm [shape: bf16[256,256], index: 5, kind: input, shape index: {}]
  %s6 = inlined_call_operand.vmem [shape: f32[1,256], index: 6, kind: input, shape index: {}]
  %s7 = inlined_call_operand.hbm [shape: bf16[256,256], index: 7, kind: input, shape index: {}]
  %s8 = inlined_call_operand.hbm [shape: f32[1,256], index: 8, kind: input, shape index: {}]
  %s9 = inlined_call_operand.vmem [shape: bf16[128,8], index: 9, kind: input, shape index: {}]
  %s10 = inlined_call_operand.vmem [shape: f32[1,8], index: 10, kind: input, shape index: {}]
  %s11 = inlined_call_operand.vmem [shape: bf16[128,128], index: 11, kind: input, shape index: {}]
  %s12 = inlined_call_operand.vmem [shape: f32[1,128], index: 12, kind: input, shape index: {}]
  %s13 = inlined_call_operand.vmem [shape: f32[128,8], index: 13, kind: input, shape index: {}]
  %s14 = inlined_call_operand.hbm [shape: f32[8,128], index: 14, kind: input, shape index: {}]
  %s15 = inlined_call_operand.hbm [shape: f32[128,128], index: 15, kind: output, shape index: {}]
  %s16 = sld [smem:[#allocation0]]
  $region90: #{tpu_custom_call.1} parent=0
    _
  %s18 = ssub.s32 1, %s16
  %s19 = scalar_select 0, %s18, %s16
  $region1: #{tpu_custom_call.1} parent=0
    #allocation2 [shape = 'u8[8192]{0}', space=vmem, size = 0x2000, scoped, tag = 'input window, operand 1, single buffered']
    #allocation3 [shape = 's32[1]{0}', space=sflag, size = 0x4, scoped, tag = 'scoped memory for tpu_custom_call.1']
    #allocation4 [shape = 's32[1]{0}', space=sflag, size = 0x4, scoped, tag = 'scoped memory for tpu_custom_call.1']
    #allocation5 [shape = 'u8[131072]{0}', space=vmem, size = 0x20000, scoped, tag = 'input window, operand 5, single buffered']
    #allocation6 [shape = 's32[1]{0}', space=sflag, size = 0x4, scoped, tag = 'scoped memory for tpu_custom_call.1']
    #allocation7 [shape = 'u8[131072]{0}', space=vmem, size = 0x20000, scoped, tag = 'input window, operand 7, single buffered']
    #allocation8 [shape = 'u8[1024]{0}', space=vmem, size = 0x400, scoped, tag = 'input window, operand 8, single buffered']
    #allocation9 [shape = 's32[1]{0}', space=sflag, size = 0x4, scoped, tag = 'scoped memory for tpu_custom_call.1']
    #allocation10 [shape = 'u8[4096]{0}', space=vmem, size = 0x1000, scoped, tag = 'input window, operand 14, single buffered']
    #allocation11 [shape = 'u8[65536]{0}', space=vmem, size = 0x10000, scoped, tag = 'output window, operand 0, single buffered']
    %20 = vsyncpa [#allocation3], 0
    %21 = vsyncpa [#allocation6], 0
    %22 = vsyncpa [#allocation9], 0
    %23 = vsyncpa [#allocation4], 0
    // Predicated region
    $region2: #{tpu_custom_call.1} parent=1 // pred_check
      _
    $region3: #{tpu_custom_call.1} parent=1 // pred_check_branch
      %25 = sbr.rel (0) target = $region5
    $region4: #{tpu_custom_call.1} parent=1 // pred_region
      _
    $region5: #{tpu_custom_call.1} parent=1 // pred_fallthru
      _
    // Predicated region
    $region6: #{tpu_custom_call.1} parent=1 // pred_check
      _
    $region7: #{tpu_custom_call.1} parent=1 // pred_check_branch
      %27 = sbr.rel (0) target = $region9
    $region8: #{tpu_custom_call.1} parent=1 // pred_region
      %29 = vsyncadd [#allocation3], 0
      %s30 = sshll.u32 %s1, 4
      %s31 = int_to_ptr.hbm [resolvable:$true] %s30
      %s32 = sshll.u32 [#allocation2], 4
      %s33 = int_to_ptr.vmem [resolvable:$true] %s32
      %38 = dma.hbm_to_vmem [thread:$0]  %s31, 256, %s33, [#allocation3], 128, 128, 8
    $region9: #{tpu_custom_call.1} parent=1 // pred_fallthru
      _
    // Predicated region
    $region10: #{tpu_custom_call.1} parent=1 // pred_check
      _
    $region11: #{tpu_custom_call.1} parent=1 // pred_check_branch
      %40 = sbr.rel (0) target = $region13
    $region12: #{tpu_custom_call.1} parent=1 // pred_region
      _
    $region13: #{tpu_custom_call.1} parent=1 // pred_fallthru
      _
    // Predicated region
    $region14: #{tpu_custom_call.1} parent=1 // pred_check
      _
    $region15: #{tpu_custom_call.1} parent=1 // pred_check_branch
      %42 = sbr.rel (0) target = $region17
    $region16: #{tpu_custom_call.1} parent=1 // pred_region
      _
    $region17: #{tpu_custom_call.1} parent=1 // pred_fallthru
      _
    // Predicated region
    $region18: #{tpu_custom_call.1} parent=1 // pred_check
      _
    $region19: #{tpu_custom_call.1} parent=1 // pred_check_branch
      %44 = sbr.rel (0) target = $region21
    $region20: #{tpu_custom_call.1} parent=1 // pred_region
      _
    $region21: #{tpu_custom_call.1} parent=1 // pred_fallthru
      _
    // Predicated region
    $region22: #{tpu_custom_call.1} parent=1 // pred_check
      _
    $region23: #{tpu_custom_call.1} parent=1 // pred_check_branch
      %46 = sbr.rel (0) target = $region25
    $region24: #{tpu_custom_call.1} parent=1 // pred_region
      %48 = vsyncadd [#allocation6], 0
      %s49 = sshll.u32 %s5, 4
      %s50 = int_to_ptr.hbm [resolvable:$true] %s49
      %s51 = sshll.u32 [#allocation5], 4
      %s52 = int_to_ptr.vmem [resolvable:$true] %s51
      %57 = dma.hbm_to_vmem [thread:$0]  %s50, 4096, %s52, [#allocation6], 128, 128, 8
    $region25: #{tpu_custom_call.1} parent=1 // pred_fallthru
      _
    // Predicated region
    $region26: #{tpu_custom_call.1} parent=1 // pred_check
      _
    $region27: #{tpu_custom_call.1} parent=1 // pred_check_branch
      %59 = sbr.rel (0) target = $region29
    $region28: #{tpu_custom_call.1} parent=1 // pred_region
      _
    $region29: #{tpu_custom_call.1} parent=1 // pred_fallthru
      _
    // Predicated region
    $region30: #{tpu_custom_call.1} parent=1 // pred_check
      _
    $region31: #{tpu_custom_call.1} parent=1 // pred_check_branch
      %61 = sbr.rel (0) target = $region33
    $region32: #{tpu_custom_call.1} parent=1 // pred_region
      %63 = vsyncadd [#allocation6], 0
      %s64 = sshll.u32 %s7, 4
      %s65 = int_to_ptr.hbm [resolvable:$true] %s64
      %s66 = sshll.u32 [#allocation7], 4
      %s67 = int_to_ptr.vmem [resolvable:$true] %s66
      %72 = dma.hbm_to_vmem [thread:$0]  %s65, 4096, %s67, [#allocation6], 128, 128, 8
    $region33: #{tpu_custom_call.1} parent=1 // pred_fallthru
      _
    // Predicated region
    $region34: #{tpu_custom_call.1} parent=1 // pred_check
      _
    $region35: #{tpu_custom_call.1} parent=1 // pred_check_branch
      %74 = sbr.rel (0) target = $region37
    $region36: #{tpu_custom_call.1} parent=1 // pred_region
      %76 = vsyncadd [#allocation9], 0
      %s78 = sshll.u32 %s8, 4
      %s79 = int_to_ptr.hbm [resolvable:$true] %s78
      %s80 = sshll.u32 [#allocation8], 4
      %s81 = int_to_ptr.vmem [resolvable:$true] %s80
      %83 = dma.hbm_to_vmem [thread:$0]  %s79, 32, %s81, [#allocation9]
    $region37: #{tpu_custom_call.1} parent=1 // pred_fallthru
      _
    // Predicated region
    $region38: #{tpu_custom_call.1} parent=1 // pred_check
      _
    $region39: #{tpu_custom_call.1} parent=1 // pred_check_branch
      %85 = sbr.rel (0) target = $region41
    $region40: #{tpu_custom_call.1} parent=1 // pred_region
      _
    $region41: #{tpu_custom_call.1} parent=1 // pred_fallthru
      _
    // Predicated region
    $region42: #{tpu_custom_call.1} parent=1 // pred_check
      _
    $region43: #{tpu_custom_call.1} parent=1 // pred_check_branch
      %87 = sbr.rel (0) target = $region45
    $region44: #{tpu_custom_call.1} parent=1 // pred_region
      _
    $region45: #{tpu_custom_call.1} parent=1 // pred_fallthru
      _
    // Predicated region
    $region46: #{tpu_custom_call.1} parent=1 // pred_check
      _
    $region47: #{tpu_custom_call.1} parent=1 // pred_check_branch
      %89 = sbr.rel (0) target = $region49
    $region48: #{tpu_custom_call.1} parent=1 // pred_region
      _
    $region49: #{tpu_custom_call.1} parent=1 // pred_fallthru
      _
    // Predicated region
    $region50: #{tpu_custom_call.1} parent=1 // pred_check
      _
    $region51: #{tpu_custom_call.1} parent=1 // pred_check_branch
      %91 = sbr.rel (0) target = $region53
    $region52: #{tpu_custom_call.1} parent=1 // pred_region
      _
    $region53: #{tpu_custom_call.1} parent=1 // pred_fallthru
      _
    // Predicated region
    $region54: #{tpu_custom_call.1} parent=1 // pred_check
      _
    $region55: #{tpu_custom_call.1} parent=1 // pred_check_branch
      %93 = sbr.rel (0) target = $region57
    $region56: #{tpu_custom_call.1} parent=1 // pred_region
      _
    $region57: #{tpu_custom_call.1} parent=1 // pred_fallthru
      _
    // Predicated region
    $region58: #{tpu_custom_call.1} parent=1 // pred_check
      _
    $region59: #{tpu_custom_call.1} parent=1 // pred_check_branch
      %95 = sbr.rel (0) target = $region61
    $region60: #{tpu_custom_call.1} parent=1 // pred_region
      %97 = vsyncadd [#allocation9], 0
      %s99 = sshll.u32 %s14, 4
      %s100 = int_to_ptr.hbm [resolvable:$true] %s99
      %s101 = sshll.u32 [#allocation10], 4
      %s102 = int_to_ptr.vmem [resolvable:$true] %s101
      %104 = dma.hbm_to_vmem [thread:$0]  %s100, 128, %s102, [#allocation9]
    $region61: #{tpu_custom_call.1} parent=1 // pred_fallthru
      _
    // Predicated region
    $region62: #{tpu_custom_call.1} parent=1 // pred_check
      _
    $region63: #{tpu_custom_call.1} parent=1 // pred_check_branch
      %106 = sbr.rel (0) target = $region65
    $region64: #{tpu_custom_call.1} parent=1 // pred_region
      %108 = dma.done [#allocation3], 256
    $region65: #{tpu_custom_call.1} parent=1 // pred_fallthru
      _
    // Predicated region
    $region66: #{tpu_custom_call.1} parent=1 // pred_check
      _
    $region67: #{tpu_custom_call.1} parent=1 // pred_check_branch
      %110 = sbr.rel (0) target = $region69
    $region68: #{tpu_custom_call.1} parent=1 // pred_region
      %112 = dma.done [#allocation6], 4096
    $region69: #{tpu_custom_call.1} parent=1 // pred_fallthru
      _
    // Predicated region
    $region70: #{tpu_custom_call.1} parent=1 // pred_check
      _
    $region71: #{tpu_custom_call.1} parent=1 // pred_check_branch
      %114 = sbr.rel (0) target = $region73
    $region72: #{tpu_custom_call.1} parent=1 // pred_region
      %116 = dma.done [#allocation6], 4096
    $region73: #{tpu_custom_call.1} parent=1 // pred_fallthru
      _
    // Predicated region
    $region74: #{tpu_custom_call.1} parent=1 // pred_check
      _
    $region75: #{tpu_custom_call.1} parent=1 // pred_check_branch
      %118 = sbr.rel (0) target = $region77
    $region76: #{tpu_custom_call.1} parent=1 // pred_region
      %120 = dma.done [#allocation9], 32
    $region77: #{tpu_custom_call.1} parent=1 // pred_fallthru
      _
    // Predicated region
    $region78: #{tpu_custom_call.1} parent=1 // pred_check
      _
    $region79: #{tpu_custom_call.1} parent=1 // pred_check_branch
      %122 = sbr.rel (0) target = $region81
    $region80: #{tpu_custom_call.1} parent=1 // pred_region
      %124 = dma.done [#allocation9], 128
    $region81: #{tpu_custom_call.1} parent=1 // pred_fallthru
      _
    %v126 = vld [vmem:[%s0] sm:$0xff]
    %v127 = vld [vmem:[%s0 + $0x8] sm:$0xff]
    %v128 = vld [vmem:[%s0 + $0x10] sm:$0xff]
    %v129 = vld [vmem:[%s0 + $0x18] sm:$0xff]
    %v130 = vld [vmem:[%s0 + $0x20] sm:$0xff]
    %v131 = vld [vmem:[%s0 + $0x28] sm:$0xff]
    %v132 = vld [vmem:[%s0 + $0x30] sm:$0xff]
    %v133 = vld [vmem:[%s0 + $0x38] sm:$0xff]
    %v134 = vld [vmem:[%s0 + $0x40] sm:$0xff]
    %v135 = vld [vmem:[%s0 + $0x48] sm:$0xff]
    %v136 = vld [vmem:[%s0 + $0x50] sm:$0xff]
    %v137 = vld [vmem:[%s0 + $0x58] sm:$0xff]
    %v138 = vld [vmem:[%s0 + $0x60] sm:$0xff]
    %v139 = vld [vmem:[%s0 + $0x68] sm:$0xff]
    %v140 = vld [vmem:[%s0 + $0x70] sm:$0xff]
    %v141 = vld [vmem:[%s0 + $0x78] sm:$0xff]
    %v142 = vpack.c.bf16 %v127, %v126
    %v143 = vpack.c.bf16 %v129, %v128
    %v144 = vpack.c.bf16 %v131, %v130
    %v145 = vpack.c.bf16 %v133, %v132
    %v146 = vpack.c.bf16 %v135, %v134
    %v147 = vpack.c.bf16 %v137, %v136
    %v148 = vpack.c.bf16 %v139, %v138
    %v149 = vpack.c.bf16 %v141, %v140
    %v150 = vld [vmem:[#allocation2] sm:$0xff]
    %v151 = vld [vmem:[#allocation2 + $0x8] sm:$0xff]
    %v152 = vld [vmem:[%s2] sm:$0x3]
    %v154 = vperm.slane %v152, 0
    %v155 = vperm.slane %v152, 1
    %v160 = vunpack.c.l.b16 %v150
    %v161 = vunpack.c.h.b16 %v150
    %v162 = vunpack.c.l.b16 %v151
    %v163 = vunpack.c.h.b16 %v151
    %v164 = vpack.c.b16 %v162, %v160
    %v165 = vpack.c.b16 %v163, %v161
    %vm168 = vcmask 130048
    %v170 = vsel %vm168, %v142, 0
    %v173 = vsel %vm168, %v143, 0
    %v176 = vsel %vm168, %v144, 0
    %v179 = vsel %vm168, %v145, 0
    %v182 = vsel %vm168, %v146, 0
    %v185 = vsel %vm168, %v147, 0
    %v188 = vsel %vm168, %v148, 0
    %v191 = vsel %vm168, %v149, 0
    %193 = vmatpush.bf16.msra.mxu0 0
    %194 = vmatpush.bf16.msra.mxu0 0
    %195 = vmatpush.bf16.msra.mxu0 0
    %196 = vmatpush.bf16.msra.mxu0 0
    %197 = vmatpush.bf16.msra.mxu0 0
    %198 = vmatpush.bf16.msra.mxu0 0
    %199 = vmatpush.bf16.msra.mxu0 0
    %200 = vmatpush.bf16.msra.mxu0 %v164
    %201 = vmatmul.bf16.gmra.mxu0 %v170
    %v202 = vpop.f32.mrf.mxu0
    %v203 = vadd.f32 %v154, %v202
    %v204 = vpop.f32.mrf.mxu0
    %v205 = vadd.f32 %v154, %v204
    %206 = vmatmul.bf16.gmra.mxu0 %v173
    %v207 = vpop.f32.mrf.mxu0
    %v208 = vadd.f32 %v154, %v207
    %v209 = vpop.f32.mrf.mxu0
    %v210 = vadd.f32 %v154, %v209
    %211 = vmatmul.bf16.gmra.mxu0 %v176
    %v212 = vpop.f32.mrf.mxu0
    %v213 = vadd.f32 %v154, %v212
    %v214 = vpop.f32.mrf.mxu0
    %v215 = vadd.f32 %v154, %v214
    %216 = vmatmul.bf16.gmra.mxu0 %v179
    %v217 = vpop.f32.mrf.mxu0
    %v218 = vadd.f32 %v154, %v217
    %v219 = vpop.f32.mrf.mxu0
    %v220 = vadd.f32 %v154, %v219
    %221 = vmatmul.bf16.gmra.mxu0 %v182
    %v222 = vpop.f32.mrf.mxu0
    %v223 = vadd.f32 %v154, %v222
    %v224 = vpop.f32.mrf.mxu0
    %v225 = vadd.f32 %v154, %v224
    %226 = vmatmul.bf16.gmra.mxu0 %v185
    %v227 = vpop.f32.mrf.mxu0
    %v228 = vadd.f32 %v154, %v227
    %v229 = vpop.f32.mrf.mxu0
    %v230 = vadd.f32 %v154, %v229
    %231 = vmatmul.bf16.gmra.mxu0 %v188
    %v232 = vpop.f32.mrf.mxu0
    %v233 = vadd.f32 %v154, %v232
    %v234 = vpop.f32.mrf.mxu0
    %v235 = vadd.f32 %v154, %v234
    %236 = vmatmul.bf16.gmra.mxu0 %v191
    %v237 = vpop.f32.mrf.mxu0
    %v238 = vadd.f32 %v154, %v237
    %v239 = vpop.f32.mrf.mxu0
    %v240 = vadd.f32 %v154, %v239
    %241 = vdwg.mxu0
    %242 = vmatpush.bf16.msra.mxu0 0
    %243 = vmatpush.bf16.msra.mxu0 0
    %244 = vmatpush.bf16.msra.mxu0 0
    %245 = vmatpush.bf16.msra.mxu0 0
    %246 = vmatpush.bf16.msra.mxu0 0
    %247 = vmatpush.bf16.msra.mxu0 0
    %248 = vmatpush.bf16.msra.mxu0 0
    %249 = vmatpush.bf16.msra.mxu0 %v165
    %250 = vmatmul.bf16.gmra.mxu0 %v170
    %v251 = vpop.f32.mrf.mxu0
    %v252 = vadd.f32 %v155, %v251
    %v253 = vpop.f32.mrf.mxu0
    %v254 = vadd.f32 %v155, %v253
    %255 = vmatmul.bf16.gmra.mxu0 %v173
    %v256 = vpop.f32.mrf.mxu0
    %v257 = vadd.f32 %v155, %v256
    %v258 = vpop.f32.mrf.mxu0
    %v259 = vadd.f32 %v155, %v258
    %260 = vmatmul.bf16.gmra.mxu0 %v176
    %v261 = vpop.f32.mrf.mxu0
    %v262 = vadd.f32 %v155, %v261
    %v263 = vpop.f32.mrf.mxu0
    %v264 = vadd.f32 %v155, %v263
    %265 = vmatmul.bf16.gmra.mxu0 %v179
    %v266 = vpop.f32.mrf.mxu0
    %v267 = vadd.f32 %v155, %v266
    %v268 = vpop.f32.mrf.mxu0
    %v269 = vadd.f32 %v155, %v268
    %270 = vmatmul.bf16.gmra.mxu0 %v182
    %v271 = vpop.f32.mrf.mxu0
    %v272 = vadd.f32 %v155, %v271
    %v273 = vpop.f32.mrf.mxu0
    %v274 = vadd.f32 %v155, %v273
    %275 = vmatmul.bf16.gmra.mxu0 %v185
    %v276 = vpop.f32.mrf.mxu0
    %v277 = vadd.f32 %v155, %v276
    %v278 = vpop.f32.mrf.mxu0
    %v279 = vadd.f32 %v155, %v278
    %280 = vmatmul.bf16.gmra.mxu0 %v188
    %v281 = vpop.f32.mrf.mxu0
    %v282 = vadd.f32 %v155, %v281
    %v283 = vpop.f32.mrf.mxu0
    %v284 = vadd.f32 %v155, %v283
    %285 = vmatmul.bf16.gmra.mxu0 %v191
    %v286 = vpop.f32.mrf.mxu0
    %v287 = vadd.f32 %v155, %v286
    %v288 = vpop.f32.mrf.mxu0
    %v289 = vadd.f32 %v155, %v288
    %290 = vdwg.mxu0
    %v291 = vmax.f32 %v203, 0.0
    %v292 = vmax.f32 %v252, 0.0
    %v293 = vmax.f32 %v205, 0.0
    %v294 = vmax.f32 %v254, 0.0
    %v295 = vmax.f32 %v208, 0.0
    %v296 = vmax.f32 %v257, 0.0
    %v297 = vmax.f32 %v210, 0.0
    %v298 = vmax.f32 %v259, 0.0
    %v299 = vmax.f32 %v213, 0.0
    %v300 = vmax.f32 %v262, 0.0
    %v301 = vmax.f32 %v215, 0.0
    %v302 = vmax.f32 %v264, 0.0
    %v303 = vmax.f32 %v218, 0.0
    %v304 = vmax.f32 %v267, 0.0
    %v305 = vmax.f32 %v220, 0.0
    %v306 = vmax.f32 %v269, 0.0
    %v307 = vmax.f32 %v223, 0.0
    %v308 = vmax.f32 %v272, 0.0
    %v309 = vmax.f32 %v225, 0.0
    %v310 = vmax.f32 %v274, 0.0
    %v311 = vmax.f32 %v228, 0.0
    %v312 = vmax.f32 %v277, 0.0
    %v313 = vmax.f32 %v230, 0.0
    %v314 = vmax.f32 %v279, 0.0
    %v315 = vmax.f32 %v233, 0.0
    %v316 = vmax.f32 %v282, 0.0
    %v317 = vmax.f32 %v235, 0.0
    %v318 = vmax.f32 %v284, 0.0
    %v319 = vmax.f32 %v238, 0.0
    %v320 = vmax.f32 %v287, 0.0
    %v321 = vmax.f32 %v240, 0.0
    %v322 = vmax.f32 %v289, 0.0
    %v323 = vpack.c.bf16 %v293, %v291
    %v324 = vpack.c.bf16 %v294, %v292
    %v325 = vpack.c.bf16 %v297, %v295
    %v326 = vpack.c.bf16 %v298, %v296
    %v327 = vpack.c.bf16 %v301, %v299
    %v328 = vpack.c.bf16 %v302, %v300
    %v329 = vpack.c.bf16 %v305, %v303
    %v330 = vpack.c.bf16 %v306, %v304
    %v331 = vpack.c.bf16 %v309, %v307
    %v332 = vpack.c.bf16 %v310, %v308
    %v333 = vpack.c.bf16 %v313, %v311
    %v334 = vpack.c.bf16 %v314, %v312
    %v335 = vpack.c.bf16 %v317, %v315
    %v336 = vpack.c.bf16 %v318, %v316
    %v337 = vpack.c.bf16 %v321, %v319
    %v338 = vpack.c.bf16 %v322, %v320
    %v339 = vld [vmem:[%s3] sm:$0xff]
    %v340 = vld [vmem:[%s3 + $0x8] sm:$0xff]
    %v341 = vld [vmem:[%s3 + $0x10] sm:$0xff]
    %v342 = vld [vmem:[%s3 + $0x18] sm:$0xff]
    %v343 = vld [vmem:[%s3 + $0x20] sm:$0xff]
    %v344 = vld [vmem:[%s3 + $0x28] sm:$0xff]
    %v345 = vld [vmem:[%s3 + $0x30] sm:$0xff]
    %v346 = vld [vmem:[%s3 + $0x38] sm:$0xff]
    %v347 = vld [vmem:[%s3 + $0x40] sm:$0xff]
    %v348 = vld [vmem:[%s3 + $0x48] sm:$0xff]
    %v349 = vld [vmem:[%s3 + $0x50] sm:$0xff]
    %v350 = vld [vmem:[%s3 + $0x58] sm:$0xff]
    %v351 = vld [vmem:[%s3 + $0x60] sm:$0xff]
    %v352 = vld [vmem:[%s3 + $0x68] sm:$0xff]
    %v353 = vld [vmem:[%s3 + $0x70] sm:$0xff]
    %v354 = vld [vmem:[%s3 + $0x78] sm:$0xff]
    %v355 = vld [vmem:[%s3 + $0x80] sm:$0xff]
    %v356 = vld [vmem:[%s3 + $0x88] sm:$0xff]
    %v357 = vld [vmem:[%s3 + $0x90] sm:$0xff]
    %v358 = vld [vmem:[%s3 + $0x98] sm:$0xff]
    %v359 = vld [vmem:[%s3 + $0xa0] sm:$0xff]
    %v360 = vld [vmem:[%s3 + $0xa8] sm:$0xff]
    %v361 = vld [vmem:[%s3 + $0xb0] sm:$0xff]
    %v362 = vld [vmem:[%s3 + $0xb8] sm:$0xff]
    %v363 = vld [vmem:[%s3 + $0xc0] sm:$0xff]
    %v364 = vld [vmem:[%s3 + $0xc8] sm:$0xff]
    %v365 = vld [vmem:[%s3 + $0xd0] sm:$0xff]
    %v366 = vld [vmem:[%s3 + $0xd8] sm:$0xff]
    %v367 = vld [vmem:[%s3 + $0xe0] sm:$0xff]
    %v368 = vld [vmem:[%s3 + $0xe8] sm:$0xff]
    %v369 = vld [vmem:[%s3 + $0xf0] sm:$0xff]
    %v370 = vld [vmem:[%s3 + $0xf8] sm:$0xff]
    %v371 = vld [vmem:[%s4] sm:$0x3]
    %v373 = vperm.slane %v371, 0
    %v374 = vperm.slane %v371, 1
    %v409 = vunpack.c.l.b16 %v339
    %v410 = vunpack.c.h.b16 %v339
    %v411 = vunpack.c.l.b16 %v340
    %v412 = vunpack.c.h.b16 %v340
    %v413 = vunpack.c.l.b16 %v341
    %v414 = vunpack.c.h.b16 %v341
    %v415 = vunpack.c.l.b16 %v342
    %v416 = vunpack.c.h.b16 %v342
    %v417 = vunpack.c.l.b16 %v343
    %v418 = vunpack.c.h.b16 %v343
    %v419 = vunpack.c.l.b16 %v344
    %v420 = vunpack.c.h.b16 %v344
    %v421 = vunpack.c.l.b16 %v345
    %v422 = vunpack.c.h.b16 %v345
    %v423 = vunpack.c.l.b16 %v346
    %v424 = vunpack.c.h.b16 %v346
    %v425 = vunpack.c.l.b16 %v347
    %v426 = vunpack.c.h.b16 %v347
    %v427 = vunpack.c.l.b16 %v348
    %v428 = vunpack.c.h.b16 %v348
    %v429 = vunpack.c.l.b16 %v349
    %v430 = vunpack.c.h.b16 %v349
    %v431 = vunpack.c.l.b16 %v350
    %v432 = vunpack.c.h.b16 %v350
    %v433 = vunpack.c.l.b16 %v351
    %v434 = vunpack.c.h.b16 %v351
    %v435 = vunpack.c.l.b16 %v352
    %v436 = vunpack.c.h.b16 %v352
    %v437 = vunpack.c.l.b16 %v353
    %v438 = vunpack.c.h.b16 %v353
    %v439 = vunpack.c.l.b16 %v354
    %v440 = vunpack.c.h.b16 %v354
    %v441 = vunpack.c.l.b16 %v355
    %v442 = vunpack.c.h.b16 %v355
    %v443 = vunpack.c.l.b16 %v356
    %v444 = vunpack.c.h.b16 %v356
    %v445 = vunpack.c.l.b16 %v357
    %v446 = vunpack.c.h.b16 %v357
    %v447 = vunpack.c.l.b16 %v358
    %v448 = vunpack.c.h.b16 %v358
    %v449 = vunpack.c.l.b16 %v359
    %v450 = vunpack.c.h.b16 %v359
    %v451 = vunpack.c.l.b16 %v360
    %v452 = vunpack.c.h.b16 %v360
    %v453 = vunpack.c.l.b16 %v361
    %v454 = vunpack.c.h.b16 %v361
    %v455 = vunpack.c.l.b16 %v362
    %v456 = vunpack.c.h.b16 %v362
    %v457 = vunpack.c.l.b16 %v363
    %v458 = vunpack.c.h.b16 %v363
    %v459 = vunpack.c.l.b16 %v364
    %v460 = vunpack.c.h.b16 %v364
    %v461 = vunpack.c.l.b16 %v365
    %v462 = vunpack.c.h.b16 %v365
    %v463 = vunpack.c.l.b16 %v366
    %v464 = vunpack.c.h.b16 %v366
    %v465 = vunpack.c.l.b16 %v367
    %v466 = vunpack.c.h.b16 %v367
    %v467 = vunpack.c.l.b16 %v368
    %v468 = vunpack.c.h.b16 %v368
    %v469 = vunpack.c.l.b16 %v369
    %v470 = vunpack.c.h.b16 %v369
    %v471 = vunpack.c.l.b16 %v370
    %v472 = vunpack.c.h.b16 %v370
    %v473 = vpack.c.b16 %v411, %v409
    %v474 = vpack.c.b16 %v412, %v410
    %v475 = vpack.c.b16 %v415, %v413
    %v476 = vpack.c.b16 %v416, %v414
    %v477 = vpack.c.b16 %v419, %v417
    %v478 = vpack.c.b16 %v420, %v418
    %v479 = vpack.c.b16 %v423, %v421
    %v480 = vpack.c.b16 %v424, %v422
    %v481 = vpack.c.b16 %v427, %v425
    %v482 = vpack.c.b16 %v428, %v426
    %v483 = vpack.c.b16 %v431, %v429
    %v484 = vpack.c.b16 %v432, %v430
    %v485 = vpack.c.b16 %v435, %v433
    %v486 = vpack.c.b16 %v436, %v434
    %v487 = vpack.c.b16 %v439, %v437
    %v488 = vpack.c.b16 %v440, %v438
    %v489 = vpack.c.b16 %v443, %v441
    %v490 = vpack.c.b16 %v444, %v442
    %v491 = vpack.c.b16 %v447, %v445
    %v492 = vpack.c.b16 %v448, %v446
    %v493 = vpack.c.b16 %v451, %v449
    %v494 = vpack.c.b16 %v452, %v450
    %v495 = vpack.c.b16 %v455, %v453
    %v496 = vpack.c.b16 %v456, %v454
    %v497 = vpack.c.b16 %v459, %v457
    %v498 = vpack.c.b16 %v460, %v458
    %v499 = vpack.c.b16 %v463, %v461
    %v500 = vpack.c.b16 %v464, %v462
    %v501 = vpack.c.b16 %v467, %v465
    %v502 = vpack.c.b16 %v468, %v466
    %v503 = vpack.c.b16 %v471, %v469
    %v504 = vpack.c.b16 %v472, %v470
    %537 = vmatpush.bf16.msra.mxu0 %v487
    %538 = vmatpush.bf16.msra.mxu0 %v485
    %539 = vmatpush.bf16.msra.mxu0 %v483
    %540 = vmatpush.bf16.msra.mxu0 %v481
    %541 = vmatpush.bf16.msra.mxu0 %v479
    %542 = vmatpush.bf16.msra.mxu0 %v477
    %543 = vmatpush.bf16.msra.mxu0 %v475
    %544 = vmatpush.bf16.msra.mxu0 %v473
    %545 = vmatmul.bf16.gmra.mxu0 %v323
    %v546 = vpop.f32.mrf.mxu0
    %v547 = vadd.f32 %v373, %v546
    %v548 = vpop.f32.mrf.mxu0
    %v549 = vadd.f32 %v373, %v548
    %550 = vmatmul.bf16.gmra.mxu0 %v325
    %v551 = vpop.f32.mrf.mxu0
    %v552 = vadd.f32 %v373, %v551
    %v553 = vpop.f32.mrf.mxu0
    %v554 = vadd.f32 %v373, %v553
    %555 = vmatmul.bf16.gmra.mxu0 %v327
    %v556 = vpop.f32.mrf.mxu0
    %v557 = vadd.f32 %v373, %v556
    %v558 = vpop.f32.mrf.mxu0
    %v559 = vadd.f32 %v373, %v558
    %560 = vmatmul.bf16.gmra.mxu0 %v329
    %v561 = vpop.f32.mrf.mxu0
    %v562 = vadd.f32 %v373, %v561
    %v563 = vpop.f32.mrf.mxu0
    %v564 = vadd.f32 %v373, %v563
    %565 = vmatmul.bf16.gmra.mxu0 %v331
    %v566 = vpop.f32.mrf.mxu0
    %v567 = vadd.f32 %v373, %v566
    %v568 = vpop.f32.mrf.mxu0
    %v569 = vadd.f32 %v373, %v568
    %570 = vmatmul.bf16.gmra.mxu0 %v333
    %v571 = vpop.f32.mrf.mxu0
    %v572 = vadd.f32 %v373, %v571
    %v573 = vpop.f32.mrf.mxu0
    %v574 = vadd.f32 %v373, %v573
    %575 = vmatmul.bf16.gmra.mxu0 %v335
    %v576 = vpop.f32.mrf.mxu0
    %v577 = vadd.f32 %v373, %v576
    %v578 = vpop.f32.mrf.mxu0
    %v579 = vadd.f32 %v373, %v578
    %580 = vmatmul.bf16.gmra.mxu0 %v337
    %v581 = vpop.f32.mrf.mxu0
    %v582 = vadd.f32 %v373, %v581
    %v583 = vpop.f32.mrf.mxu0
    %v584 = vadd.f32 %v373, %v583
    %585 = vdwg.mxu0
    %586 = vmatpush.bf16.msra.mxu0 %v503
    %587 = vmatpush.bf16.msra.mxu0 %v501
    %588 = vmatpush.bf16.msra.mxu0 %v499
    %589 = vmatpush.bf16.msra.mxu0 %v497
    %590 = vmatpush.bf16.msra.mxu0 %v495
    %591 = vmatpush.bf16.msra.mxu0 %v493
    %592 = vmatpush.bf16.msra.mxu0 %v491
    %593 = vmatpush.bf16.msra.mxu0 %v489
    %594 = vmatmul.bf16.gmra.mxu0 %v324
    %v595 = vpop.f32.mrf.mxu0
    %v596 = vadd.f32 %v547, %v595
    %v597 = vpop.f32.mrf.mxu0
    %v598 = vadd.f32 %v549, %v597
    %599 = vmatmul.bf16.gmra.mxu0 %v326
    %v600 = vpop.f32.mrf.mxu0
    %v601 = vadd.f32 %v552, %v600
    %v602 = vpop.f32.mrf.mxu0
    %v603 = vadd.f32 %v554, %v602
    %604 = vmatmul.bf16.gmra.mxu0 %v328
    %v605 = vpop.f32.mrf.mxu0
    %v606 = vadd.f32 %v557, %v605
    %v607 = vpop.f32.mrf.mxu0
    %v608 = vadd.f32 %v559, %v607
    %609 = vmatmul.bf16.gmra.mxu0 %v330
    %v610 = vpop.f32.mrf.mxu0
    %v611 = vadd.f32 %v562, %v610
    %v612 = vpop.f32.mrf.mxu0
    %v613 = vadd.f32 %v564, %v612
    %614 = vmatmul.bf16.gmra.mxu0 %v332
    %v615 = vpop.f32.mrf.mxu0
    %v616 = vadd.f32 %v567, %v615
    %v617 = vpop.f32.mrf.mxu0
    %v618 = vadd.f32 %v569, %v617
    %619 = vmatmul.bf16.gmra.mxu0 %v334
    %v620 = vpop.f32.mrf.mxu0
    %v621 = vadd.f32 %v572, %v620
    %v622 = vpop.f32.mrf.mxu0
    %v623 = vadd.f32 %v574, %v622
    %624 = vmatmul.bf16.gmra.mxu0 %v336
    %v625 = vpop.f32.mrf.mxu0
    %v626 = vadd.f32 %v577, %v625
    %v627 = vpop.f32.mrf.mxu0
    %v628 = vadd.f32 %v579, %v627
    %629 = vmatmul.bf16.gmra.mxu0 %v338
    %v630 = vpop.f32.mrf.mxu0
    %v631 = vadd.f32 %v582, %v630
    %v632 = vpop.f32.mrf.mxu0
    %v633 = vadd.f32 %v584, %v632
    %634 = vdwg.mxu0
    %635 = vmatpush.bf16.msra.mxu0 %v488
    %636 = vmatpush.bf16.msra.mxu0 %v486
    %637 = vmatpush.bf16.msra.mxu0 %v484
    %638 = vmatpush.bf16.msra.mxu0 %v482
    %639 = vmatpush.bf16.msra.mxu0 %v480
    %640 = vmatpush.bf16.msra.mxu0 %v478
    %641 = vmatpush.bf16.msra.mxu0 %v476
    %642 = vmatpush.bf16.msra.mxu0 %v474
    %643 = vmatmul.bf16.gmra.mxu0 %v323
    %v644 = vpop.f32.mrf.mxu0
    %v645 = vadd.f32 %v374, %v644
    %v646 = vpop.f32.mrf.mxu0
    %v647 = vadd.f32 %v374, %v646
    %648 = vmatmul.bf16.gmra.mxu0 %v325
    %v649 = vpop.f32.mrf.mxu0
    %v650 = vadd.f32 %v374, %v649
    %v651 = vpop.f32.mrf.mxu0
    %v652 = vadd.f32 %v374, %v651
    %653 = vmatmul.bf16.gmra.mxu0 %v327
    %v654 = vpop.f32.mrf.mxu0
    %v655 = vadd.f32 %v374, %v654
    %v656 = vpop.f32.mrf.mxu0
    %v657 = vadd.f32 %v374, %v656
    %658 = vmatmul.bf16.gmra.mxu0 %v329
    %v659 = vpop.f32.mrf.mxu0
    %v660 = vadd.f32 %v374, %v659
    %v661 = vpop.f32.mrf.mxu0
    %v662 = vadd.f32 %v374, %v661
    %663 = vmatmul.bf16.gmra.mxu0 %v331
    %v664 = vpop.f32.mrf.mxu0
    %v665 = vadd.f32 %v374, %v664
    %v666 = vpop.f32.mrf.mxu0
    %v667 = vadd.f32 %v374, %v666
    %668 = vmatmul.bf16.gmra.mxu0 %v333
    %v669 = vpop.f32.mrf.mxu0
    %v670 = vadd.f32 %v374, %v669
    %v671 = vpop.f32.mrf.mxu0
    %v672 = vadd.f32 %v374, %v671
    %673 = vmatmul.bf16.gmra.mxu0 %v335
    %v674 = vpop.f32.mrf.mxu0
    %v675 = vadd.f32 %v374, %v674
    %v676 = vpop.f32.mrf.mxu0
    %v677 = vadd.f32 %v374, %v676
    %678 = vmatmul.bf16.gmra.mxu0 %v337
    %v679 = vpop.f32.mrf.mxu0
    %v680 = vadd.f32 %v374, %v679
    %v681 = vpop.f32.mrf.mxu0
    %v682 = vadd.f32 %v374, %v681
    %683 = vdwg.mxu0
    %684 = vmatpush.bf16.msra.mxu0 %v504
    %685 = vmatpush.bf16.msra.mxu0 %v502
    %686 = vmatpush.bf16.msra.mxu0 %v500
    %687 = vmatpush.bf16.msra.mxu0 %v498
    %688 = vmatpush.bf16.msra.mxu0 %v496
    %689 = vmatpush.bf16.msra.mxu0 %v494
    %690 = vmatpush.bf16.msra.mxu0 %v492
    %691 = vmatpush.bf16.msra.mxu0 %v490
    %692 = vmatmul.bf16.gmra.mxu0 %v324
    %v693 = vpop.f32.mrf.mxu0
    %v694 = vadd.f32 %v645, %v693
    %v695 = vpop.f32.mrf.mxu0
    %v696 = vadd.f32 %v647, %v695
    %697 = vmatmul.bf16.gmra.mxu0 %v326
    %v698 = vpop.f32.mrf.mxu0
    %v699 = vadd.f32 %v650, %v698
    %v700 = vpop.f32.mrf.mxu0
    %v701 = vadd.f32 %v652, %v700
    %702 = vmatmul.bf16.gmra.mxu0 %v328
    %v703 = vpop.f32.mrf.mxu0
    %v704 = vadd.f32 %v655, %v703
    %v705 = vpop.f32.mrf.mxu0
    %v706 = vadd.f32 %v657, %v705
    %707 = vmatmul.bf16.gmra.mxu0 %v330
    %v708 = vpop.f32.mrf.mxu0
    %v709 = vadd.f32 %v660, %v708
    %v710 = vpop.f32.mrf.mxu0
    %v711 = vadd.f32 %v662, %v710
    %712 = vmatmul.bf16.gmra.mxu0 %v332
    %v713 = vpop.f32.mrf.mxu0
    %v714 = vadd.f32 %v665, %v713
    %v715 = vpop.f32.mrf.mxu0
    %v716 = vadd.f32 %v667, %v715
    %717 = vmatmul.bf16.gmra.mxu0 %v334
    %v718 = vpop.f32.mrf.mxu0
    %v719 = vadd.f32 %v670, %v718
    %v720 = vpop.f32.mrf.mxu0
    %v721 = vadd.f32 %v672, %v720
    %722 = vmatmul.bf16.gmra.mxu0 %v336
    %v723 = vpop.f32.mrf.mxu0
    %v724 = vadd.f32 %v675, %v723
    %v725 = vpop.f32.mrf.mxu0
    %v726 = vadd.f32 %v677, %v725
    %727 = vmatmul.bf16.gmra.mxu0 %v338
    %v728 = vpop.f32.mrf.mxu0
    %v729 = vadd.f32 %v680, %v728
    %v730 = vpop.f32.mrf.mxu0
    %v731 = vadd.f32 %v682, %v730
    %732 = vdwg.mxu0
    %v733 = vmax.f32 %v596, 0.0
    %v734 = vmax.f32 %v694, 0.0
    %v735 = vmax.f32 %v598, 0.0
    %v736 = vmax.f32 %v696, 0.0
    %v737 = vmax.f32 %v601, 0.0
    %v738 = vmax.f32 %v699, 0.0
    %v739 = vmax.f32 %v603, 0.0
    %v740 = vmax.f32 %v701, 0.0
    %v741 = vmax.f32 %v606, 0.0
    %v742 = vmax.f32 %v704, 0.0
    %v743 = vmax.f32 %v608, 0.0
    %v744 = vmax.f32 %v706, 0.0
    %v745 = vmax.f32 %v611, 0.0
    %v746 = vmax.f32 %v709, 0.0
    %v747 = vmax.f32 %v613, 0.0
    %v748 = vmax.f32 %v711, 0.0
    %v749 = vmax.f32 %v616, 0.0
    %v750 = vmax.f32 %v714, 0.0
    %v751 = vmax.f32 %v618, 0.0
    %v752 = vmax.f32 %v716, 0.0
    %v753 = vmax.f32 %v621, 0.0
    %v754 = vmax.f32 %v719, 0.0
    %v755 = vmax.f32 %v623, 0.0
    %v756 = vmax.f32 %v721, 0.0
    %v757 = vmax.f32 %v626, 0.0
    %v758 = vmax.f32 %v724, 0.0
    %v759 = vmax.f32 %v628, 0.0
    %v760 = vmax.f32 %v726, 0.0
    %v761 = vmax.f32 %v631, 0.0
    %v762 = vmax.f32 %v729, 0.0
    %v763 = vmax.f32 %v633, 0.0
    %v764 = vmax.f32 %v731, 0.0
    %v765 = vpack.c.bf16 %v735, %v733
    %v766 = vpack.c.bf16 %v736, %v734
    %v767 = vpack.c.bf16 %v739, %v737
    %v768 = vpack.c.bf16 %v740, %v738
    %v769 = vpack.c.bf16 %v743, %v741
    %v770 = vpack.c.bf16 %v744, %v742
    %v771 = vpack.c.bf16 %v747, %v745
    %v772 = vpack.c.bf16 %v748, %v746
    %v773 = vpack.c.bf16 %v751, %v749
    %v774 = vpack.c.bf16 %v752, %v750
    %v775 = vpack.c.bf16 %v755, %v753
    %v776 = vpack.c.bf16 %v756, %v754
    %v777 = vpack.c.bf16 %v759, %v757
    %v778 = vpack.c.bf16 %v760, %v758
    %v779 = vpack.c.bf16 %v763, %v761
    %v780 = vpack.c.bf16 %v764, %v762
    %v781 = vld [vmem:[#allocation5] sm:$0xff]
    %v782 = vld [vmem:[#allocation5 + $0x8] sm:$0xff]
    %v783 = vld [vmem:[#allocation5 + $0x10] sm:$0xff]
    %v784 = vld [vmem:[#allocation5 + $0x18] sm:$0xff]
    %v785 = vld [vmem:[#allocation5 + $0x20] sm:$0xff]
    %v786 = vld [vmem:[#allocation5 + $0x28] sm:$0xff]
    %v787 = vld [vmem:[#allocation5 + $0x30] sm:$0xff]
    %v788 = vld [vmem:[#allocation5 + $0x38] sm:$0xff]
    %v789 = vld [vmem:[#allocation5 + $0x40] sm:$0xff]
    %v790 = vld [vmem:[#allocation5 + $0x48] sm:$0xff]
    %v791 = vld [vmem:[#allocation5 + $0x50] sm:$0xff]
    %v792 = vld [vmem:[#allocation5 + $0x58] sm:$0xff]
    %v793 = vld [vmem:[#allocation5 + $0x60] sm:$0xff]
    %v794 = vld [vmem:[#allocation5 + $0x68] sm:$0xff]
    %v795 = vld [vmem:[#allocation5 + $0x70] sm:$0xff]
    %v796 = vld [vmem:[#allocation5 + $0x78] sm:$0xff]
    %v797 = vld [vmem:[#allocation5 + $0x80] sm:$0xff]
    %v798 = vld [vmem:[#allocation5 + $0x88] sm:$0xff]
    %v799 = vld [vmem:[#allocation5 + $0x90] sm:$0xff]
    %v800 = vld [vmem:[#allocation5 + $0x98] sm:$0xff]
    %v801 = vld [vmem:[#allocation5 + $0xa0] sm:$0xff]
    %v802 = vld [vmem:[#allocation5 + $0xa8] sm:$0xff]
    %v803 = vld [vmem:[#allocation5 + $0xb0] sm:$0xff]
    %v804 = vld [vmem:[#allocation5 + $0xb8] sm:$0xff]
    %v805 = vld [vmem:[#allocation5 + $0xc0] sm:$0xff]
    %v806 = vld [vmem:[#allocation5 + $0xc8] sm:$0xff]
    %v807 = vld [vmem:[#allocation5 + $0xd0] sm:$0xff]
    %v808 = vld [vmem:[#allocation5 + $0xd8] sm:$0xff]
    %v809 = vld [vmem:[#allocation5 + $0xe0] sm:$0xff]
    %v810 = vld [vmem:[#allocation5 + $0xe8] sm:$0xff]
    %v811 = vld [vmem:[#allocation5 + $0xf0] sm:$0xff]
    %v812 = vld [vmem:[#allocation5 + $0xf8] sm:$0xff]
    %v813 = vld [vmem:[%s6] sm:$0x3]
    %v815 = vperm.slane %v813, 0
    %v816 = vperm.slane %v813, 1
    %v851 = vunpack.c.l.b16 %v781
    %v852 = vunpack.c.h.b16 %v781
    %v853 = vunpack.c.l.b16 %v782
    %v854 = vunpack.c.h.b16 %v782
    %v855 = vunpack.c.l.b16 %v783
    %v856 = vunpack.c.h.b16 %v783
    %v857 = vunpack.c.l.b16 %v784
    %v858 = vunpack.c.h.b16 %v784
    %v859 = vunpack.c.l.b16 %v785
    %v860 = vunpack.c.h.b16 %v785
    %v861 = vunpack.c.l.b16 %v786
    %v862 = vunpack.c.h.b16 %v786
    %v863 = vunpack.c.l.b16 %v787
    %v864 = vunpack.c.h.b16 %v787
    %v865 = vunpack.c.l.b16 %v788
    %v866 = vunpack.c.h.b16 %v788
    %v867 = vunpack.c.l.b16 %v789
    %v868 = vunpack.c.h.b16 %v789
    %v869 = vunpack.c.l.b16 %v790
    %v870 = vunpack.c.h.b16 %v790
    %v871 = vunpack.c.l.b16 %v791
    %v872 = vunpack.c.h.b16 %v791
    %v873 = vunpack.c.l.b16 %v792
    %v874 = vunpack.c.h.b16 %v792
    %v875 = vunpack.c.l.b16 %v793
    %v876 = vunpack.c.h.b16 %v793
    %v877 = vunpack.c.l.b16 %v794
    %v878 = vunpack.c.h.b16 %v794
    %v879 = vunpack.c.l.b16 %v795
    %v880 = vunpack.c.h.b16 %v795
    %v881 = vunpack.c.l.b16 %v796
    %v882 = vunpack.c.h.b16 %v796
    %v883 = vunpack.c.l.b16 %v797
    %v884 = vunpack.c.h.b16 %v797
    %v885 = vunpack.c.l.b16 %v798
    %v886 = vunpack.c.h.b16 %v798
    %v887 = vunpack.c.l.b16 %v799
    %v888 = vunpack.c.h.b16 %v799
    %v889 = vunpack.c.l.b16 %v800
    %v890 = vunpack.c.h.b16 %v800
    %v891 = vunpack.c.l.b16 %v801
    %v892 = vunpack.c.h.b16 %v801
    %v893 = vunpack.c.l.b16 %v802
    %v894 = vunpack.c.h.b16 %v802
    %v895 = vunpack.c.l.b16 %v803
    %v896 = vunpack.c.h.b16 %v803
    %v897 = vunpack.c.l.b16 %v804
    %v898 = vunpack.c.h.b16 %v804
    %v899 = vunpack.c.l.b16 %v805
    %v900 = vunpack.c.h.b16 %v805
    %v901 = vunpack.c.l.b16 %v806
    %v902 = vunpack.c.h.b16 %v806
    %v903 = vunpack.c.l.b16 %v807
    %v904 = vunpack.c.h.b16 %v807
    %v905 = vunpack.c.l.b16 %v808
    %v906 = vunpack.c.h.b16 %v808
    %v907 = vunpack.c.l.b16 %v809
    %v908 = vunpack.c.h.b16 %v809
    %v909 = vunpack.c.l.b16 %v810
    %v910 = vunpack.c.h.b16 %v810
    %v911 = vunpack.c.l.b16 %v811
    %v912 = vunpack.c.h.b16 %v811
    %v913 = vunpack.c.l.b16 %v812
    %v914 = vunpack.c.h.b16 %v812
    %v915 = vpack.c.b16 %v853, %v851
    %v916 = vpack.c.b16 %v854, %v852
    %v917 = vpack.c.b16 %v857, %v855
    %v918 = vpack.c.b16 %v858, %v856
    %v919 = vpack.c.b16 %v861, %v859
    %v920 = vpack.c.b16 %v862, %v860
    %v921 = vpack.c.b16 %v865, %v863
    %v922 = vpack.c.b16 %v866, %v864
    %v923 = vpack.c.b16 %v869, %v867
    %v924 = vpack.c.b16 %v870, %v868
    %v925 = vpack.c.b16 %v873, %v871
    %v926 = vpack.c.b16 %v874, %v872
    %v927 = vpack.c.b16 %v877, %v875
    %v928 = vpack.c.b16 %v878, %v876
    %v929 = vpack.c.b16 %v881, %v879
    %v930 = vpack.c.b16 %v882, %v880
    %v931 = vpack.c.b16 %v885, %v883
    %v932 = vpack.c.b16 %v886, %v884
    %v933 = vpack.c.b16 %v889, %v887
    %v934 = vpack.c.b16 %v890, %v888
    %v935 = vpack.c.b16 %v893, %v891
    %v936 = vpack.c.b16 %v894, %v892
    %v937 = vpack.c.b16 %v897, %v895
    %v938 = vpack.c.b16 %v898, %v896
    %v939 = vpack.c.b16 %v901, %v899
    %v940 = vpack.c.b16 %v902, %v900
    %v941 = vpack.c.b16 %v905, %v903
    %v942 = vpack.c.b16 %v906, %v904
    %v943 = vpack.c.b16 %v909, %v907
    %v944 = vpack.c.b16 %v910, %v908
    %v945 = vpack.c.b16 %v913, %v911
    %v946 = vpack.c.b16 %v914, %v912
    %979 = vmatpush.bf16.msra.mxu0 %v929
    %980 = vmatpush.bf16.msra.mxu0 %v927
    %981 = vmatpush.bf16.msra.mxu0 %v925
    %982 = vmatpush.bf16.msra.mxu0 %v923
    %983 = vmatpush.bf16.msra.mxu0 %v921
    %984 = vmatpush.bf16.msra.mxu0 %v919
    %985 = vmatpush.bf16.msra.mxu0 %v917
    %986 = vmatpush.bf16.msra.mxu0 %v915
    %987 = vmatmul.bf16.gmra.mxu0 %v765
    %v988 = vpop.f32.mrf.mxu0
    %v989 = vadd.f32 %v815, %v988
    %v990 = vpop.f32.mrf.mxu0
    %v991 = vadd.f32 %v815, %v990
    %992 = vmatmul.bf16.gmra.mxu0 %v767
    %v993 = vpop.f32.mrf.mxu0
    %v994 = vadd.f32 %v815, %v993
    %v995 = vpop.f32.mrf.mxu0
    %v996 = vadd.f32 %v815, %v995
    %997 = vmatmul.bf16.gmra.mxu0 %v769
    %v998 = vpop.f32.mrf.mxu0
    %v999 = vadd.f32 %v815, %v998
    %v1000 = vpop.f32.mrf.mxu0
    %v1001 = vadd.f32 %v815, %v1000
    %1002 = vmatmul.bf16.gmra.mxu0 %v771
    %v1003 = vpop.f32.mrf.mxu0
    %v1004 = vadd.f32 %v815, %v1003
    %v1005 = vpop.f32.mrf.mxu0
    %v1006 = vadd.f32 %v815, %v1005
    %1007 = vmatmul.bf16.gmra.mxu0 %v773
    %v1008 = vpop.f32.mrf.mxu0
    %v1009 = vadd.f32 %v815, %v1008
    %v1010 = vpop.f32.mrf.mxu0
    %v1011 = vadd.f32 %v815, %v1010
    %1012 = vmatmul.bf16.gmra.mxu0 %v775
    %v1013 = vpop.f32.mrf.mxu0
    %v1014 = vadd.f32 %v815, %v1013
    %v1015 = vpop.f32.mrf.mxu0
    %v1016 = vadd.f32 %v815, %v1015
    %1017 = vmatmul.bf16.gmra.mxu0 %v777
    %v1018 = vpop.f32.mrf.mxu0
    %v1019 = vadd.f32 %v815, %v1018
    %v1020 = vpop.f32.mrf.mxu0
    %v1021 = vadd.f32 %v815, %v1020
    %1022 = vmatmul.bf16.gmra.mxu0 %v779
    %v1023 = vpop.f32.mrf.mxu0
    %v1024 = vadd.f32 %v815, %v1023
    %v1025 = vpop.f32.mrf.mxu0
    %v1026 = vadd.f32 %v815, %v1025
    %1027 = vdwg.mxu0
    %1028 = vmatpush.bf16.msra.mxu0 %v945
    %1029 = vmatpush.bf16.msra.mxu0 %v943
    %1030 = vmatpush.bf16.msra.mxu0 %v941
    %1031 = vmatpush.bf16.msra.mxu0 %v939
    %1032 = vmatpush.bf16.msra.mxu0 %v937
    %1033 = vmatpush.bf16.msra.mxu0 %v935
    %1034 = vmatpush.bf16.msra.mxu0 %v933
    %1035 = vmatpush.bf16.msra.mxu0 %v931
    %1036 = vmatmul.bf16.gmra.mxu0 %v766
    %v1037 = vpop.f32.mrf.mxu0
    %v1038 = vadd.f32 %v989, %v1037
    %v1039 = vpop.f32.mrf.mxu0
    %v1040 = vadd.f32 %v991, %v1039
    %1041 = vmatmul.bf16.gmra.mxu0 %v768
    %v1042 = vpop.f32.mrf.mxu0
    %v1043 = vadd.f32 %v994, %v1042
    %v1044 = vpop.f32.mrf.mxu0
    %v1045 = vadd.f32 %v996, %v1044
    %1046 = vmatmul.bf16.gmra.mxu0 %v770
    %v1047 = vpop.f32.mrf.mxu0
    %v1048 = vadd.f32 %v999, %v1047
    %v1049 = vpop.f32.mrf.mxu0
    %v1050 = vadd.f32 %v1001, %v1049
    %1051 = vmatmul.bf16.gmra.mxu0 %v772
    %v1052 = vpop.f32.mrf.mxu0
    %v1053 = vadd.f32 %v1004, %v1052
    %v1054 = vpop.f32.mrf.mxu0
    %v1055 = vadd.f32 %v1006, %v1054
    %1056 = vmatmul.bf16.gmra.mxu0 %v774
    %v1057 = vpop.f32.mrf.mxu0
    %v1058 = vadd.f32 %v1009, %v1057
    %v1059 = vpop.f32.mrf.mxu0
    %v1060 = vadd.f32 %v1011, %v1059
    %1061 = vmatmul.bf16.gmra.mxu0 %v776
    %v1062 = vpop.f32.mrf.mxu0
    %v1063 = vadd.f32 %v1014, %v1062
    %v1064 = vpop.f32.mrf.mxu0
    %v1065 = vadd.f32 %v1016, %v1064
    %1066 = vmatmul.bf16.gmra.mxu0 %v778
    %v1067 = vpop.f32.mrf.mxu0
    %v1068 = vadd.f32 %v1019, %v1067
    %v1069 = vpop.f32.mrf.mxu0
    %v1070 = vadd.f32 %v1021, %v1069
    %1071 = vmatmul.bf16.gmra.mxu0 %v780
    %v1072 = vpop.f32.mrf.mxu0
    %v1073 = vadd.f32 %v1024, %v1072
    %v1074 = vpop.f32.mrf.mxu0
    %v1075 = vadd.f32 %v1026, %v1074
    %1076 = vdwg.mxu0
    %1077 = vmatpush.bf16.msra.mxu0 %v930
    %1078 = vmatpush.bf16.msra.mxu0 %v928
    %1079 = vmatpush.bf16.msra.mxu0 %v926
    %1080 = vmatpush.bf16.msra.mxu0 %v924
    %1081 = vmatpush.bf16.msra.mxu0 %v922
    %1082 = vmatpush.bf16.msra.mxu0 %v920
    %1083 = vmatpush.bf16.msra.mxu0 %v918
    %1084 = vmatpush.bf16.msra.mxu0 %v916
    %1085 = vmatmul.bf16.gmra.mxu0 %v765
    %v1086 = vpop.f32.mrf.mxu0
    %v1087 = vadd.f32 %v816, %v1086
    %v1088 = vpop.f32.mrf.mxu0
    %v1089 = vadd.f32 %v816, %v1088
    %1090 = vmatmul.bf16.gmra.mxu0 %v767
    %v1091 = vpop.f32.mrf.mxu0
    %v1092 = vadd.f32 %v816, %v1091
    %v1093 = vpop.f32.mrf.mxu0
    %v1094 = vadd.f32 %v816, %v1093
    %1095 = vmatmul.bf16.gmra.mxu0 %v769
    %v1096 = vpop.f32.mrf.mxu0
    %v1097 = vadd.f32 %v816, %v1096
    %v1098 = vpop.f32.mrf.mxu0
    %v1099 = vadd.f32 %v816, %v1098
    %1100 = vmatmul.bf16.gmra.mxu0 %v771
    %v1101 = vpop.f32.mrf.mxu0
    %v1102 = vadd.f32 %v816, %v1101
    %v1103 = vpop.f32.mrf.mxu0
    %v1104 = vadd.f32 %v816, %v1103
    %1105 = vmatmul.bf16.gmra.mxu0 %v773
    %v1106 = vpop.f32.mrf.mxu0
    %v1107 = vadd.f32 %v816, %v1106
    %v1108 = vpop.f32.mrf.mxu0
    %v1109 = vadd.f32 %v816, %v1108
    %1110 = vmatmul.bf16.gmra.mxu0 %v775
    %v1111 = vpop.f32.mrf.mxu0
    %v1112 = vadd.f32 %v816, %v1111
    %v1113 = vpop.f32.mrf.mxu0
    %v1114 = vadd.f32 %v816, %v1113
    %1115 = vmatmul.bf16.gmra.mxu0 %v777
    %v1116 = vpop.f32.mrf.mxu0
    %v1117 = vadd.f32 %v816, %v1116
    %v1118 = vpop.f32.mrf.mxu0
    %v1119 = vadd.f32 %v816, %v1118
    %1120 = vmatmul.bf16.gmra.mxu0 %v779
    %v1121 = vpop.f32.mrf.mxu0
    %v1122 = vadd.f32 %v816, %v1121
    %v1123 = vpop.f32.mrf.mxu0
    %v1124 = vadd.f32 %v816, %v1123
    %1125 = vdwg.mxu0
    %1126 = vmatpush.bf16.msra.mxu0 %v946
    %1127 = vmatpush.bf16.msra.mxu0 %v944
    %1128 = vmatpush.bf16.msra.mxu0 %v942
    %1129 = vmatpush.bf16.msra.mxu0 %v940
    %1130 = vmatpush.bf16.msra.mxu0 %v938
    %1131 = vmatpush.bf16.msra.mxu0 %v936
    %1132 = vmatpush.bf16.msra.mxu0 %v934
    %1133 = vmatpush.bf16.msra.mxu0 %v932
    %1134 = vmatmul.bf16.gmra.mxu0 %v766
    %v1135 = vpop.f32.mrf.mxu0
    %v1136 = vadd.f32 %v1087, %v1135
    %v1137 = vpop.f32.mrf.mxu0
    %v1138 = vadd.f32 %v1089, %v1137
    %1139 = vmatmul.bf16.gmra.mxu0 %v768
    %v1140 = vpop.f32.mrf.mxu0
    %v1141 = vadd.f32 %v1092, %v1140
    %v1142 = vpop.f32.mrf.mxu0
    %v1143 = vadd.f32 %v1094, %v1142
    %1144 = vmatmul.bf16.gmra.mxu0 %v770
    %v1145 = vpop.f32.mrf.mxu0
    %v1146 = vadd.f32 %v1097, %v1145
    %v1147 = vpop.f32.mrf.mxu0
    %v1148 = vadd.f32 %v1099, %v1147
    %1149 = vmatmul.bf16.gmra.mxu0 %v772
    %v1150 = vpop.f32.mrf.mxu0
    %v1151 = vadd.f32 %v1102, %v1150
    %v1152 = vpop.f32.mrf.mxu0
    %v1153 = vadd.f32 %v1104, %v1152
    %1154 = vmatmul.bf16.gmra.mxu0 %v774
    %v1155 = vpop.f32.mrf.mxu0
    %v1156 = vadd.f32 %v1107, %v1155
    %v1157 = vpop.f32.mrf.mxu0
    %v1158 = vadd.f32 %v1109, %v1157
    %1159 = vmatmul.bf16.gmra.mxu0 %v776
    %v1160 = vpop.f32.mrf.mxu0
    %v1161 = vadd.f32 %v1112, %v1160
    %v1162 = vpop.f32.mrf.mxu0
    %v1163 = vadd.f32 %v1114, %v1162
    %1164 = vmatmul.bf16.gmra.mxu0 %v778
    %v1165 = vpop.f32.mrf.mxu0
    %v1166 = vadd.f32 %v1117, %v1165
    %v1167 = vpop.f32.mrf.mxu0
    %v1168 = vadd.f32 %v1119, %v1167
    %1169 = vmatmul.bf16.gmra.mxu0 %v780
    %v1170 = vpop.f32.mrf.mxu0
    %v1171 = vadd.f32 %v1122, %v1170
    %v1172 = vpop.f32.mrf.mxu0
    %v1173 = vadd.f32 %v1124, %v1172
    %1174 = vdwg.mxu0
    %v1175 = vmax.f32 %v1038, 0.0
    %v1176 = vmax.f32 %v1136, 0.0
    %v1177 = vmax.f32 %v1040, 0.0
    %v1178 = vmax.f32 %v1138, 0.0
    %v1179 = vmax.f32 %v1043, 0.0
    %v1180 = vmax.f32 %v1141, 0.0
    %v1181 = vmax.f32 %v1045, 0.0
    %v1182 = vmax.f32 %v1143, 0.0
    %v1183 = vmax.f32 %v1048, 0.0
    %v1184 = vmax.f32 %v1146, 0.0
    %v1185 = vmax.f32 %v1050, 0.0
    %v1186 = vmax.f32 %v1148, 0.0
    %v1187 = vmax.f32 %v1053, 0.0
    %v1188 = vmax.f32 %v1151, 0.0
    %v1189 = vmax.f32 %v1055, 0.0
    %v1190 = vmax.f32 %v1153, 0.0
    %v1191 = vmax.f32 %v1058, 0.0
    %v1192 = vmax.f32 %v1156, 0.0
    %v1193 = vmax.f32 %v1060, 0.0
    %v1194 = vmax.f32 %v1158, 0.0
    %v1195 = vmax.f32 %v1063, 0.0
    %v1196 = vmax.f32 %v1161, 0.0
    %v1197 = vmax.f32 %v1065, 0.0
    %v1198 = vmax.f32 %v1163, 0.0
    %v1199 = vmax.f32 %v1068, 0.0
    %v1200 = vmax.f32 %v1166, 0.0
    %v1201 = vmax.f32 %v1070, 0.0
    %v1202 = vmax.f32 %v1168, 0.0
    %v1203 = vmax.f32 %v1073, 0.0
    %v1204 = vmax.f32 %v1171, 0.0
    %v1205 = vmax.f32 %v1075, 0.0
    %v1206 = vmax.f32 %v1173, 0.0
    %v1207 = vpack.c.bf16 %v1177, %v1175
    %v1208 = vpack.c.bf16 %v1178, %v1176
    %v1209 = vpack.c.bf16 %v1181, %v1179
    %v1210 = vpack.c.bf16 %v1182, %v1180
    %v1211 = vpack.c.bf16 %v1185, %v1183
    %v1212 = vpack.c.bf16 %v1186, %v1184
    %v1213 = vpack.c.bf16 %v1189, %v1187
    %v1214 = vpack.c.bf16 %v1190, %v1188
    %v1215 = vpack.c.bf16 %v1193, %v1191
    %v1216 = vpack.c.bf16 %v1194, %v1192
    %v1217 = vpack.c.bf16 %v1197, %v1195
    %v1218 = vpack.c.bf16 %v1198, %v1196
    %v1219 = vpack.c.bf16 %v1201, %v1199
    %v1220 = vpack.c.bf16 %v1202, %v1200
    %v1221 = vpack.c.bf16 %v1205, %v1203
    %v1222 = vpack.c.bf16 %v1206, %v1204
    %v1223 = vld [vmem:[#allocation7] sm:$0xff]
    %v1224 = vld [vmem:[#allocation7 + $0x8] sm:$0xff]
    %v1225 = vld [vmem:[#allocation7 + $0x10] sm:$0xff]
    %v1226 = vld [vmem:[#allocation7 + $0x18] sm:$0xff]
    %v1227 = vld [vmem:[#allocation7 + $0x20] sm:$0xff]
    %v1228 = vld [vmem:[#allocation7 + $0x28] sm:$0xff]
    %v1229 = vld [vmem:[#allocation7 + $0x30] sm:$0xff]
    %v1230 = vld [vmem:[#allocation7 + $0x38] sm:$0xff]
    %v1231 = vld [vmem:[#allocation7 + $0x40] sm:$0xff]
    %v1232 = vld [vmem:[#allocation7 + $0x48] sm:$0xff]
    %v1233 = vld [vmem:[#allocation7 + $0x50] sm:$0xff]
    %v1234 = vld [vmem:[#allocation7 + $0x58] sm:$0xff]
    %v1235 = vld [vmem:[#allocation7 + $0x60] sm:$0xff]
    %v1236 = vld [vmem:[#allocation7 + $0x68] sm:$0xff]
    %v1237 = vld [vmem:[#allocation7 + $0x70] sm:$0xff]
    %v1238 = vld [vmem:[#allocation7 + $0x78] sm:$0xff]
    %v1239 = vld [vmem:[#allocation7 + $0x80] sm:$0xff]
    %v1240 = vld [vmem:[#allocation7 + $0x88] sm:$0xff]
    %v1241 = vld [vmem:[#allocation7 + $0x90] sm:$0xff]
    %v1242 = vld [vmem:[#allocation7 + $0x98] sm:$0xff]
    %v1243 = vld [vmem:[#allocation7 + $0xa0] sm:$0xff]
    %v1244 = vld [vmem:[#allocation7 + $0xa8] sm:$0xff]
    %v1245 = vld [vmem:[#allocation7 + $0xb0] sm:$0xff]
    %v1246 = vld [vmem:[#allocation7 + $0xb8] sm:$0xff]
    %v1247 = vld [vmem:[#allocation7 + $0xc0] sm:$0xff]
    %v1248 = vld [vmem:[#allocation7 + $0xc8] sm:$0xff]
    %v1249 = vld [vmem:[#allocation7 + $0xd0] sm:$0xff]
    %v1250 = vld [vmem:[#allocation7 + $0xd8] sm:$0xff]
    %v1251 = vld [vmem:[#allocation7 + $0xe0] sm:$0xff]
    %v1252 = vld [vmem:[#allocation7 + $0xe8] sm:$0xff]
    %v1253 = vld [vmem:[#allocation7 + $0xf0] sm:$0xff]
    %v1254 = vld [vmem:[#allocation7 + $0xf8] sm:$0xff]
    %v1255 = vld [vmem:[#allocation8] sm:$0x3]
    %v1257 = vperm.slane %v1255, 0
    %v1258 = vperm.slane %v1255, 1
    %v1293 = vunpack.c.l.b16 %v1223
    %v1294 = vunpack.c.h.b16 %v1223
    %v1295 = vunpack.c.l.b16 %v1224
    %v1296 = vunpack.c.h.b16 %v1224
    %v1297 = vunpack.c.l.b16 %v1225
    %v1298 = vunpack.c.h.b16 %v1225
    %v1299 = vunpack.c.l.b16 %v1226
    %v1300 = vunpack.c.h.b16 %v1226
    %v1301 = vunpack.c.l.b16 %v1227
    %v1302 = vunpack.c.h.b16 %v1227
    %v1303 = vunpack.c.l.b16 %v1228
    %v1304 = vunpack.c.h.b16 %v1228
    %v1305 = vunpack.c.l.b16 %v1229
    %v1306 = vunpack.c.h.b16 %v1229
    %v1307 = vunpack.c.l.b16 %v1230
    %v1308 = vunpack.c.h.b16 %v1230
    %v1309 = vunpack.c.l.b16 %v1231
    %v1310 = vunpack.c.h.b16 %v1231
    %v1311 = vunpack.c.l.b16 %v1232
    %v1312 = vunpack.c.h.b16 %v1232
    %v1313 = vunpack.c.l.b16 %v1233
    %v1314 = vunpack.c.h.b16 %v1233
    %v1315 = vunpack.c.l.b16 %v1234
    %v1316 = vunpack.c.h.b16 %v1234
    %v1317 = vunpack.c.l.b16 %v1235
    %v1318 = vunpack.c.h.b16 %v1235
    %v1319 = vunpack.c.l.b16 %v1236
    %v1320 = vunpack.c.h.b16 %v1236
    %v1321 = vunpack.c.l.b16 %v1237
    %v1322 = vunpack.c.h.b16 %v1237
    %v1323 = vunpack.c.l.b16 %v1238
    %v1324 = vunpack.c.h.b16 %v1238
    %v1325 = vunpack.c.l.b16 %v1239
    %v1326 = vunpack.c.h.b16 %v1239
    %v1327 = vunpack.c.l.b16 %v1240
    %v1328 = vunpack.c.h.b16 %v1240
    %v1329 = vunpack.c.l.b16 %v1241
    %v1330 = vunpack.c.h.b16 %v1241
    %v1331 = vunpack.c.l.b16 %v1242
    %v1332 = vunpack.c.h.b16 %v1242
    %v1333 = vunpack.c.l.b16 %v1243
    %v1334 = vunpack.c.h.b16 %v1243
    %v1335 = vunpack.c.l.b16 %v1244
    %v1336 = vunpack.c.h.b16 %v1244
    %v1337 = vunpack.c.l.b16 %v1245
    %v1338 = vunpack.c.h.b16 %v1245
    %v1339 = vunpack.c.l.b16 %v1246
    %v1340 = vunpack.c.h.b16 %v1246
    %v1341 = vunpack.c.l.b16 %v1247
    %v1342 = vunpack.c.h.b16 %v1247
    %v1343 = vunpack.c.l.b16 %v1248
    %v1344 = vunpack.c.h.b16 %v1248
    %v1345 = vunpack.c.l.b16 %v1249
    %v1346 = vunpack.c.h.b16 %v1249
    %v1347 = vunpack.c.l.b16 %v1250
    %v1348 = vunpack.c.h.b16 %v1250
    %v1349 = vunpack.c.l.b16 %v1251
    %v1350 = vunpack.c.h.b16 %v1251
    %v1351 = vunpack.c.l.b16 %v1252
    %v1352 = vunpack.c.h.b16 %v1252
    %v1353 = vunpack.c.l.b16 %v1253
    %v1354 = vunpack.c.h.b16 %v1253
    %v1355 = vunpack.c.l.b16 %v1254
    %v1356 = vunpack.c.h.b16 %v1254
    %v1357 = vpack.c.b16 %v1295, %v1293
    %v1358 = vpack.c.b16 %v1296, %v1294
    %v1359 = vpack.c.b16 %v1299, %v1297
    %v1360 = vpack.c.b16 %v1300, %v1298
    %v1361 = vpack.c.b16 %v1303, %v1301
    %v1362 = vpack.c.b16 %v1304, %v1302
    %v1363 = vpack.c.b16 %v1307, %v1305
    %v1364 = vpack.c.b16 %v1308, %v1306
    %v1365 = vpack.c.b16 %v1311, %v1309
    %v1366 = vpack.c.b16 %v1312, %v1310
    %v1367 = vpack.c.b16 %v1315, %v1313
    %v1368 = vpack.c.b16 %v1316, %v1314
    %v1369 = vpack.c.b16 %v1319, %v1317
    %v1370 = vpack.c.b16 %v1320, %v1318
    %v1371 = vpack.c.b16 %v1323, %v1321
    %v1372 = vpack.c.b16 %v1324, %v1322
    %v1373 = vpack.c.b16 %v1327, %v1325
    %v1374 = vpack.c.b16 %v1328, %v1326
    %v1375 = vpack.c.b16 %v1331, %v1329
    %v1376 = vpack.c.b16 %v1332, %v1330
    %v1377 = vpack.c.b16 %v1335, %v1333
    %v1378 = vpack.c.b16 %v1336, %v1334
    %v1379 = vpack.c.b16 %v1339, %v1337
    %v1380 = vpack.c.b16 %v1340, %v1338
    %v1381 = vpack.c.b16 %v1343, %v1341
    %v1382 = vpack.c.b16 %v1344, %v1342
    %v1383 = vpack.c.b16 %v1347, %v1345
    %v1384 = vpack.c.b16 %v1348, %v1346
    %v1385 = vpack.c.b16 %v1351, %v1349
    %v1386 = vpack.c.b16 %v1352, %v1350
    %v1387 = vpack.c.b16 %v1355, %v1353
    %v1388 = vpack.c.b16 %v1356, %v1354
    %1421 = vmatpush.bf16.msra.mxu0 %v1371
    %1422 = vmatpush.bf16.msra.mxu0 %v1369
    %1423 = vmatpush.bf16.msra.mxu0 %v1367
    %1424 = vmatpush.bf16.msra.mxu0 %v1365
    %1425 = vmatpush.bf16.msra.mxu0 %v1363
    %1426 = vmatpush.bf16.msra.mxu0 %v1361
    %1427 = vmatpush.bf16.msra.mxu0 %v1359
    %1428 = vmatpush.bf16.msra.mxu0 %v1357
    %1429 = vmatmul.bf16.gmra.mxu0 %v1207
    %v1430 = vpop.f32.mrf.mxu0
    %v1431 = vadd.f32 %v1257, %v1430
    %v1432 = vpop.f32.mrf.mxu0
    %v1433 = vadd.f32 %v1257, %v1432
    %1434 = vmatmul.bf16.gmra.mxu0 %v1209
    %v1435 = vpop.f32.mrf.mxu0
    %v1436 = vadd.f32 %v1257, %v1435
    %v1437 = vpop.f32.mrf.mxu0
    %v1438 = vadd.f32 %v1257, %v1437
    %1439 = vmatmul.bf16.gmra.mxu0 %v1211
    %v1440 = vpop.f32.mrf.mxu0
    %v1441 = vadd.f32 %v1257, %v1440
    %v1442 = vpop.f32.mrf.mxu0
    %v1443 = vadd.f32 %v1257, %v1442
    %1444 = vmatmul.bf16.gmra.mxu0 %v1213
    %v1445 = vpop.f32.mrf.mxu0
    %v1446 = vadd.f32 %v1257, %v1445
    %v1447 = vpop.f32.mrf.mxu0
    %v1448 = vadd.f32 %v1257, %v1447
    %1449 = vmatmul.bf16.gmra.mxu0 %v1215
    %v1450 = vpop.f32.mrf.mxu0
    %v1451 = vadd.f32 %v1257, %v1450
    %v1452 = vpop.f32.mrf.mxu0
    %v1453 = vadd.f32 %v1257, %v1452
    %1454 = vmatmul.bf16.gmra.mxu0 %v1217
    %v1455 = vpop.f32.mrf.mxu0
    %v1456 = vadd.f32 %v1257, %v1455
    %v1457 = vpop.f32.mrf.mxu0
    %v1458 = vadd.f32 %v1257, %v1457
    %1459 = vmatmul.bf16.gmra.mxu0 %v1219
    %v1460 = vpop.f32.mrf.mxu0
    %v1461 = vadd.f32 %v1257, %v1460
    %v1462 = vpop.f32.mrf.mxu0
    %v1463 = vadd.f32 %v1257, %v1462
    %1464 = vmatmul.bf16.gmra.mxu0 %v1221
    %v1465 = vpop.f32.mrf.mxu0
    %v1466 = vadd.f32 %v1257, %v1465
    %v1467 = vpop.f32.mrf.mxu0
    %v1468 = vadd.f32 %v1257, %v1467
    %1469 = vdwg.mxu0
    %1470 = vmatpush.bf16.msra.mxu0 %v1387
    %1471 = vmatpush.bf16.msra.mxu0 %v1385
    %1472 = vmatpush.bf16.msra.mxu0 %v1383
    %1473 = vmatpush.bf16.msra.mxu0 %v1381
    %1474 = vmatpush.bf16.msra.mxu0 %v1379
    %1475 = vmatpush.bf16.msra.mxu0 %v1377
    %1476 = vmatpush.bf16.msra.mxu0 %v1375
    %1477 = vmatpush.bf16.msra.mxu0 %v1373
    %1478 = vmatmul.bf16.gmra.mxu0 %v1208
    %v1479 = vpop.f32.mrf.mxu0
    %v1480 = vadd.f32 %v1431, %v1479
    %v1481 = vpop.f32.mrf.mxu0
    %v1482 = vadd.f32 %v1433, %v1481
    %1483 = vmatmul.bf16.gmra.mxu0 %v1210
    %v1484 = vpop.f32.mrf.mxu0
    %v1485 = vadd.f32 %v1436, %v1484
    %v1486 = vpop.f32.mrf.mxu0
    %v1487 = vadd.f32 %v1438, %v1486
    %1488 = vmatmul.bf16.gmra.mxu0 %v1212
    %v1489 = vpop.f32.mrf.mxu0
    %v1490 = vadd.f32 %v1441, %v1489
    %v1491 = vpop.f32.mrf.mxu0
    %v1492 = vadd.f32 %v1443, %v1491
    %1493 = vmatmul.bf16.gmra.mxu0 %v1214
    %v1494 = vpop.f32.mrf.mxu0
    %v1495 = vadd.f32 %v1446, %v1494
    %v1496 = vpop.f32.mrf.mxu0
    %v1497 = vadd.f32 %v1448, %v1496
    %1498 = vmatmul.bf16.gmra.mxu0 %v1216
    %v1499 = vpop.f32.mrf.mxu0
    %v1500 = vadd.f32 %v1451, %v1499
    %v1501 = vpop.f32.mrf.mxu0
    %v1502 = vadd.f32 %v1453, %v1501
    %1503 = vmatmul.bf16.gmra.mxu0 %v1218
    %v1504 = vpop.f32.mrf.mxu0
    %v1505 = vadd.f32 %v1456, %v1504
    %v1506 = vpop.f32.mrf.mxu0
    %v1507 = vadd.f32 %v1458, %v1506
    %1508 = vmatmul.bf16.gmra.mxu0 %v1220
    %v1509 = vpop.f32.mrf.mxu0
    %v1510 = vadd.f32 %v1461, %v1509
    %v1511 = vpop.f32.mrf.mxu0
    %v1512 = vadd.f32 %v1463, %v1511
    %1513 = vmatmul.bf16.gmra.mxu0 %v1222
    %v1514 = vpop.f32.mrf.mxu0
    %v1515 = vadd.f32 %v1466, %v1514
    %v1516 = vpop.f32.mrf.mxu0
    %v1517 = vadd.f32 %v1468, %v1516
    %1518 = vdwg.mxu0
    %1519 = vmatpush.bf16.msra.mxu0 %v1372
    %1520 = vmatpush.bf16.msra.mxu0 %v1370
    %1521 = vmatpush.bf16.msra.mxu0 %v1368
    %1522 = vmatpush.bf16.msra.mxu0 %v1366
    %1523 = vmatpush.bf16.msra.mxu0 %v1364
    %1524 = vmatpush.bf16.msra.mxu0 %v1362
    %1525 = vmatpush.bf16.msra.mxu0 %v1360
    %1526 = vmatpush.bf16.msra.mxu0 %v1358
    %1527 = vmatmul.bf16.gmra.mxu0 %v1207
    %v1528 = vpop.f32.mrf.mxu0
    %v1529 = vadd.f32 %v1258, %v1528
    %v1530 = vpop.f32.mrf.mxu0
    %v1531 = vadd.f32 %v1258, %v1530
    %1532 = vmatmul.bf16.gmra.mxu0 %v1209
    %v1533 = vpop.f32.mrf.mxu0
    %v1534 = vadd.f32 %v1258, %v1533
    %v1535 = vpop.f32.mrf.mxu0
    %v1536 = vadd.f32 %v1258, %v1535
    %1537 = vmatmul.bf16.gmra.mxu0 %v1211
    %v1538 = vpop.f32.mrf.mxu0
    %v1539 = vadd.f32 %v1258, %v1538
    %v1540 = vpop.f32.mrf.mxu0
    %v1541 = vadd.f32 %v1258, %v1540
    %1542 = vmatmul.bf16.gmra.mxu0 %v1213
    %v1543 = vpop.f32.mrf.mxu0
    %v1544 = vadd.f32 %v1258, %v1543
    %v1545 = vpop.f32.mrf.mxu0
    %v1546 = vadd.f32 %v1258, %v1545
    %1547 = vmatmul.bf16.gmra.mxu0 %v1215
    %v1548 = vpop.f32.mrf.mxu0
    %v1549 = vadd.f32 %v1258, %v1548
    %v1550 = vpop.f32.mrf.mxu0
    %v1551 = vadd.f32 %v1258, %v1550
    %1552 = vmatmul.bf16.gmra.mxu0 %v1217
    %v1553 = vpop.f32.mrf.mxu0
    %v1554 = vadd.f32 %v1258, %v1553
    %v1555 = vpop.f32.mrf.mxu0
    %v1556 = vadd.f32 %v1258, %v1555
    %1557 = vmatmul.bf16.gmra.mxu0 %v1219
    %v1558 = vpop.f32.mrf.mxu0
    %v1559 = vadd.f32 %v1258, %v1558
    %v1560 = vpop.f32.mrf.mxu0
    %v1561 = vadd.f32 %v1258, %v1560
    %1562 = vmatmul.bf16.gmra.mxu0 %v1221
    %v1563 = vpop.f32.mrf.mxu0
    %v1564 = vadd.f32 %v1258, %v1563
    %v1565 = vpop.f32.mrf.mxu0
    %v1566 = vadd.f32 %v1258, %v1565
    %1567 = vdwg.mxu0
    %1568 = vmatpush.bf16.msra.mxu0 %v1388
    %1569 = vmatpush.bf16.msra.mxu0 %v1386
    %1570 = vmatpush.bf16.msra.mxu0 %v1384
    %1571 = vmatpush.bf16.msra.mxu0 %v1382
    %1572 = vmatpush.bf16.msra.mxu0 %v1380
    %1573 = vmatpush.bf16.msra.mxu0 %v1378
    %1574 = vmatpush.bf16.msra.mxu0 %v1376
    %1575 = vmatpush.bf16.msra.mxu0 %v1374
    %1576 = vmatmul.bf16.gmra.mxu0 %v1208
    %v1577 = vpop.f32.mrf.mxu0
    %v1578 = vadd.f32 %v1529, %v1577
    %v1579 = vpop.f32.mrf.mxu0
    %v1580 = vadd.f32 %v1531, %v1579
    %1581 = vmatmul.bf16.gmra.mxu0 %v1210
    %v1582 = vpop.f32.mrf.mxu0
    %v1583 = vadd.f32 %v1534, %v1582
    %v1584 = vpop.f32.mrf.mxu0
    %v1585 = vadd.f32 %v1536, %v1584
    %1586 = vmatmul.bf16.gmra.mxu0 %v1212
    %v1587 = vpop.f32.mrf.mxu0
    %v1588 = vadd.f32 %v1539, %v1587
    %v1589 = vpop.f32.mrf.mxu0
    %v1590 = vadd.f32 %v1541, %v1589
    %1591 = vmatmul.bf16.gmra.mxu0 %v1214
    %v1592 = vpop.f32.mrf.mxu0
    %v1593 = vadd.f32 %v1544, %v1592
    %v1594 = vpop.f32.mrf.mxu0
    %v1595 = vadd.f32 %v1546, %v1594
    %1596 = vmatmul.bf16.gmra.mxu0 %v1216
    %v1597 = vpop.f32.mrf.mxu0
    %v1598 = vadd.f32 %v1549, %v1597
    %v1599 = vpop.f32.mrf.mxu0
    %v1600 = vadd.f32 %v1551, %v1599
    %1601 = vmatmul.bf16.gmra.mxu0 %v1218
    %v1602 = vpop.f32.mrf.mxu0
    %v1603 = vadd.f32 %v1554, %v1602
    %v1604 = vpop.f32.mrf.mxu0
    %v1605 = vadd.f32 %v1556, %v1604
    %1606 = vmatmul.bf16.gmra.mxu0 %v1220
    %v1607 = vpop.f32.mrf.mxu0
    %v1608 = vadd.f32 %v1559, %v1607
    %v1609 = vpop.f32.mrf.mxu0
    %v1610 = vadd.f32 %v1561, %v1609
    %1611 = vmatmul.bf16.gmra.mxu0 %v1222
    %v1612 = vpop.f32.mrf.mxu0
    %v1613 = vadd.f32 %v1564, %v1612
    %v1614 = vpop.f32.mrf.mxu0
    %v1615 = vadd.f32 %v1566, %v1614
    %1616 = vdwg.mxu0
    %v1617 = vmax.f32 %v1480, 0.0
    %v1618 = vmax.f32 %v1578, 0.0
    %v1619 = vmax.f32 %v1482, 0.0
    %v1620 = vmax.f32 %v1580, 0.0
    %v1621 = vmax.f32 %v1485, 0.0
    %v1622 = vmax.f32 %v1583, 0.0
    %v1623 = vmax.f32 %v1487, 0.0
    %v1624 = vmax.f32 %v1585, 0.0
    %v1625 = vmax.f32 %v1490, 0.0
    %v1626 = vmax.f32 %v1588, 0.0
    %v1627 = vmax.f32 %v1492, 0.0
    %v1628 = vmax.f32 %v1590, 0.0
    %v1629 = vmax.f32 %v1495, 0.0
    %v1630 = vmax.f32 %v1593, 0.0
    %v1631 = vmax.f32 %v1497, 0.0
    %v1632 = vmax.f32 %v1595, 0.0
    %v1633 = vmax.f32 %v1500, 0.0
    %v1634 = vmax.f32 %v1598, 0.0
    %v1635 = vmax.f32 %v1502, 0.0
    %v1636 = vmax.f32 %v1600, 0.0
    %v1637 = vmax.f32 %v1505, 0.0
    %v1638 = vmax.f32 %v1603, 0.0
    %v1639 = vmax.f32 %v1507, 0.0
    %v1640 = vmax.f32 %v1605, 0.0
    %v1641 = vmax.f32 %v1510, 0.0
    %v1642 = vmax.f32 %v1608, 0.0
    %v1643 = vmax.f32 %v1512, 0.0
    %v1644 = vmax.f32 %v1610, 0.0
    %v1645 = vmax.f32 %v1515, 0.0
    %v1646 = vmax.f32 %v1613, 0.0
    %v1647 = vmax.f32 %v1517, 0.0
    %v1648 = vmax.f32 %v1615, 0.0
    %v1649 = vpack.c.bf16 %v1619, %v1617
    %v1650 = vpack.c.bf16 %v1623, %v1621
    %v1651 = vpack.c.bf16 %v1627, %v1625
    %v1652 = vpack.c.bf16 %v1631, %v1629
    %v1653 = vpack.c.bf16 %v1635, %v1633
    %v1654 = vpack.c.bf16 %v1639, %v1637
    %v1655 = vpack.c.bf16 %v1643, %v1641
    %v1656 = vpack.c.bf16 %v1647, %v1645
    %v1657 = vld [vmem:[%s9] sm:$0xf]
    %v1658 = vld [vmem:[%s9 + $0x4] sm:$0xf]
    %v1659 = vld [vmem:[%s9 + $0x8] sm:$0xf]
    %v1660 = vld [vmem:[%s9 + $0xc] sm:$0xf]
    %v1661 = vld [vmem:[%s9 + $0x10] sm:$0xf]
    %v1662 = vld [vmem:[%s9 + $0x14] sm:$0xf]
    %v1663 = vld [vmem:[%s9 + $0x18] sm:$0xf]
    %v1664 = vld [vmem:[%s9 + $0x1c] sm:$0xf]
    %v1665 = vld [vmem:[%s9 + $0x20] sm:$0xf]
    %v1666 = vld [vmem:[%s9 + $0x24] sm:$0xf]
    %v1667 = vld [vmem:[%s9 + $0x28] sm:$0xf]
    %v1668 = vld [vmem:[%s9 + $0x2c] sm:$0xf]
    %v1669 = vld [vmem:[%s9 + $0x30] sm:$0xf]
    %v1670 = vld [vmem:[%s9 + $0x34] sm:$0xf]
    %v1671 = vld [vmem:[%s9 + $0x38] sm:$0xf]
    %v1672 = vld [vmem:[%s9 + $0x3c] sm:$0xf]
    %v1673 = vld [vmem:[%s10] sm:$0x1]
    %v1675 = vperm.slane %v1673, 0
    %v1693 = vunpack.c.l.b16 %v1657
    %v1694 = vunpack.c.l.b16 %v1658
    %v1695 = vunpack.c.l.b16 %v1659
    %v1696 = vunpack.c.l.b16 %v1660
    %v1697 = vunpack.c.l.b16 %v1661
    %v1698 = vunpack.c.l.b16 %v1662
    %v1699 = vunpack.c.l.b16 %v1663
    %v1700 = vunpack.c.l.b16 %v1664
    %v1701 = vunpack.c.l.b16 %v1665
    %v1702 = vunpack.c.l.b16 %v1666
    %v1703 = vunpack.c.l.b16 %v1667
    %v1704 = vunpack.c.l.b16 %v1668
    %v1705 = vunpack.c.l.b16 %v1669
    %v1706 = vunpack.c.l.b16 %v1670
    %v1707 = vunpack.c.l.b16 %v1671
    %v1708 = vunpack.c.l.b16 %v1672
    %v1709 = vpack.c.b16 %v1694, %v1693
    %v1710 = vpack.c.b16 %v1696, %v1695
    %v1711 = vpack.c.b16 %v1698, %v1697
    %v1712 = vpack.c.b16 %v1700, %v1699
    %v1713 = vpack.c.b16 %v1702, %v1701
    %v1714 = vpack.c.b16 %v1704, %v1703
    %v1715 = vpack.c.b16 %v1706, %v1705
    %v1716 = vpack.c.b16 %v1708, %v1707
    %1725 = vmatpush.bf16.msra.mxu0 %v1716
    %1726 = vmatpush.bf16.msra.mxu0 %v1715
    %1727 = vmatpush.bf16.msra.mxu0 %v1714
    %1728 = vmatpush.bf16.msra.mxu0 %v1713
    %1729 = vmatpush.bf16.msra.mxu0 %v1712
    %1730 = vmatpush.bf16.msra.mxu0 %v1711
    %1731 = vmatpush.bf16.msra.mxu0 %v1710
    %1732 = vmatpush.bf16.msra.mxu0 %v1709
    %1733 = vmatmul.bf16.gmra.mxu0 %v1649
    %v1734 = vpop.f32.mrf.mxu0
    %v1735 = vadd.f32 %v1675, %v1734
    %v1736 = vpop.f32.mrf.mxu0
    %v1737 = vadd.f32 %v1675, %v1736
    %1738 = vmatmul.bf16.gmra.mxu0 %v1650
    %v1739 = vpop.f32.mrf.mxu0
    %v1740 = vadd.f32 %v1675, %v1739
    %v1741 = vpop.f32.mrf.mxu0
    %v1742 = vadd.f32 %v1675, %v1741
    %1743 = vmatmul.bf16.gmra.mxu0 %v1651
    %v1744 = vpop.f32.mrf.mxu0
    %v1745 = vadd.f32 %v1675, %v1744
    %v1746 = vpop.f32.mrf.mxu0
    %v1747 = vadd.f32 %v1675, %v1746
    %1748 = vmatmul.bf16.gmra.mxu0 %v1652
    %v1749 = vpop.f32.mrf.mxu0
    %v1750 = vadd.f32 %v1675, %v1749
    %v1751 = vpop.f32.mrf.mxu0
    %v1752 = vadd.f32 %v1675, %v1751
    %1753 = vmatmul.bf16.gmra.mxu0 %v1653
    %v1754 = vpop.f32.mrf.mxu0
    %v1755 = vadd.f32 %v1675, %v1754
    %v1756 = vpop.f32.mrf.mxu0
    %v1757 = vadd.f32 %v1675, %v1756
    %1758 = vmatmul.bf16.gmra.mxu0 %v1654
    %v1759 = vpop.f32.mrf.mxu0
    %v1760 = vadd.f32 %v1675, %v1759
    %v1761 = vpop.f32.mrf.mxu0
    %v1762 = vadd.f32 %v1675, %v1761
    %1763 = vmatmul.bf16.gmra.mxu0 %v1655
    %v1764 = vpop.f32.mrf.mxu0
    %v1765 = vadd.f32 %v1675, %v1764
    %v1766 = vpop.f32.mrf.mxu0
    %v1767 = vadd.f32 %v1675, %v1766
    %1768 = vmatmul.bf16.gmra.mxu0 %v1656
    %v1769 = vpop.f32.mrf.mxu0
    %v1770 = vadd.f32 %v1675, %v1769
    %v1771 = vpop.f32.mrf.mxu0
    %v1772 = vadd.f32 %v1675, %v1771
    %1773 = vdwg.mxu0
    %v1774 = vpack.c.bf16 %v1620, %v1618
    %v1775 = vpack.c.bf16 %v1624, %v1622
    %v1776 = vpack.c.bf16 %v1628, %v1626
    %v1777 = vpack.c.bf16 %v1632, %v1630
    %v1778 = vpack.c.bf16 %v1636, %v1634
    %v1779 = vpack.c.bf16 %v1640, %v1638
    %v1780 = vpack.c.bf16 %v1644, %v1642
    %v1781 = vpack.c.bf16 %v1648, %v1646
    %v1782 = vld [vmem:[%s11] sm:$0xf]
    %v1783 = vld [vmem:[%s11 + $0x4] sm:$0xf]
    %v1784 = vld [vmem:[%s11 + $0x8] sm:$0xf]
    %v1785 = vld [vmem:[%s11 + $0xc] sm:$0xf]
    %v1786 = vld [vmem:[%s11 + $0x10] sm:$0xf]
    %v1787 = vld [vmem:[%s11 + $0x14] sm:$0xf]
    %v1788 = vld [vmem:[%s11 + $0x18] sm:$0xf]
    %v1789 = vld [vmem:[%s11 + $0x1c] sm:$0xf]
    %v1790 = vld [vmem:[%s11 + $0x20] sm:$0xf]
    %v1791 = vld [vmem:[%s11 + $0x24] sm:$0xf]
    %v1792 = vld [vmem:[%s11 + $0x28] sm:$0xf]
    %v1793 = vld [vmem:[%s11 + $0x2c] sm:$0xf]
    %v1794 = vld [vmem:[%s11 + $0x30] sm:$0xf]
    %v1795 = vld [vmem:[%s11 + $0x34] sm:$0xf]
    %v1796 = vld [vmem:[%s11 + $0x38] sm:$0xf]
    %v1797 = vld [vmem:[%s11 + $0x3c] sm:$0xf]
    %v1798 = vld [vmem:[%s12] sm:$0x1]
    %v1800 = vperm.slane %v1798, 0
    %v1818 = vunpack.c.l.b16 %v1782
    %v1819 = vunpack.c.l.b16 %v1783
    %v1820 = vunpack.c.l.b16 %v1784
    %v1821 = vunpack.c.l.b16 %v1785
    %v1822 = vunpack.c.l.b16 %v1786
    %v1823 = vunpack.c.l.b16 %v1787
    %v1824 = vunpack.c.l.b16 %v1788
    %v1825 = vunpack.c.l.b16 %v1789
    %v1826 = vunpack.c.l.b16 %v1790
    %v1827 = vunpack.c.l.b16 %v1791
    %v1828 = vunpack.c.l.b16 %v1792
    %v1829 = vunpack.c.l.b16 %v1793
    %v1830 = vunpack.c.l.b16 %v1794
    %v1831 = vunpack.c.l.b16 %v1795
    %v1832 = vunpack.c.l.b16 %v1796
    %v1833 = vunpack.c.l.b16 %v1797
    %v1834 = vpack.c.b16 %v1819, %v1818
    %v1835 = vpack.c.b16 %v1821, %v1820
    %v1836 = vpack.c.b16 %v1823, %v1822
    %v1837 = vpack.c.b16 %v1825, %v1824
    %v1838 = vpack.c.b16 %v1827, %v1826
    %v1839 = vpack.c.b16 %v1829, %v1828
    %v1840 = vpack.c.b16 %v1831, %v1830
    %v1841 = vpack.c.b16 %v1833, %v1832
    %1850 = vmatpush.bf16.msra.mxu0 %v1841
    %1851 = vmatpush.bf16.msra.mxu0 %v1840
    %1852 = vmatpush.bf16.msra.mxu0 %v1839
    %1853 = vmatpush.bf16.msra.mxu0 %v1838
    %1854 = vmatpush.bf16.msra.mxu0 %v1837
    %1855 = vmatpush.bf16.msra.mxu0 %v1836
    %1856 = vmatpush.bf16.msra.mxu0 %v1835
    %1857 = vmatpush.bf16.msra.mxu0 %v1834
    %1858 = vmatmul.bf16.gmra.mxu0 %v1774
    %v1859 = vpop.f32.mrf.mxu0
    %v1860 = vadd.f32 %v1800, %v1859
    %v1861 = vpop.f32.mrf.mxu0
    %v1862 = vadd.f32 %v1800, %v1861
    %1863 = vmatmul.bf16.gmra.mxu0 %v1775
    %v1864 = vpop.f32.mrf.mxu0
    %v1865 = vadd.f32 %v1800, %v1864
    %v1866 = vpop.f32.mrf.mxu0
    %v1867 = vadd.f32 %v1800, %v1866
    %1868 = vmatmul.bf16.gmra.mxu0 %v1776
    %v1869 = vpop.f32.mrf.mxu0
    %v1870 = vadd.f32 %v1800, %v1869
    %v1871 = vpop.f32.mrf.mxu0
    %v1872 = vadd.f32 %v1800, %v1871
    %1873 = vmatmul.bf16.gmra.mxu0 %v1777
    %v1874 = vpop.f32.mrf.mxu0
    %v1875 = vadd.f32 %v1800, %v1874
    %v1876 = vpop.f32.mrf.mxu0
    %v1877 = vadd.f32 %v1800, %v1876
    %1878 = vmatmul.bf16.gmra.mxu0 %v1778
    %v1879 = vpop.f32.mrf.mxu0
    %v1880 = vadd.f32 %v1800, %v1879
    %v1881 = vpop.f32.mrf.mxu0
    %v1882 = vadd.f32 %v1800, %v1881
    %1883 = vmatmul.bf16.gmra.mxu0 %v1779
    %v1884 = vpop.f32.mrf.mxu0
    %v1885 = vadd.f32 %v1800, %v1884
    %v1886 = vpop.f32.mrf.mxu0
    %v1887 = vadd.f32 %v1800, %v1886
    %1888 = vmatmul.bf16.gmra.mxu0 %v1780
    %v1889 = vpop.f32.mrf.mxu0
    %v1890 = vadd.f32 %v1800, %v1889
    %v1891 = vpop.f32.mrf.mxu0
    %v1892 = vadd.f32 %v1800, %v1891
    %1893 = vmatmul.bf16.gmra.mxu0 %v1781
    %v1894 = vpop.f32.mrf.mxu0
    %v1895 = vadd.f32 %v1800, %v1894
    %v1896 = vpop.f32.mrf.mxu0
    %v1897 = vadd.f32 %v1800, %v1896
    %1898 = vdwg.mxu0
    %v1899 = vld [vmem:[%s13] sm:$0xff]
    %v1900 = vld [vmem:[%s13 + $0x8] sm:$0xff]
    %v1901 = vld [vmem:[%s13 + $0x10] sm:$0xff]
    %v1902 = vld [vmem:[%s13 + $0x18] sm:$0xff]
    %v1903 = vld [vmem:[%s13 + $0x20] sm:$0xff]
    %v1904 = vld [vmem:[%s13 + $0x28] sm:$0xff]
    %v1905 = vld [vmem:[%s13 + $0x30] sm:$0xff]
    %v1906 = vld [vmem:[%s13 + $0x38] sm:$0xff]
    %v1907 = vld [vmem:[%s13 + $0x40] sm:$0xff]
    %v1908 = vld [vmem:[%s13 + $0x48] sm:$0xff]
    %v1909 = vld [vmem:[%s13 + $0x50] sm:$0xff]
    %v1910 = vld [vmem:[%s13 + $0x58] sm:$0xff]
    %v1911 = vld [vmem:[%s13 + $0x60] sm:$0xff]
    %v1912 = vld [vmem:[%s13 + $0x68] sm:$0xff]
    %v1913 = vld [vmem:[%s13 + $0x70] sm:$0xff]
    %v1914 = vld [vmem:[%s13 + $0x78] sm:$0xff]
    %1915 = vmatpush.msra.mxu0 %v1914
    %1916 = vmatpush.msra.mxu0 %v1913
    %1917 = vmatpush.msra.mxu0 %v1912
    %1918 = vmatpush.msra.mxu0 %v1911
    %1919 = vmatpush.msra.mxu0 %v1910
    %1920 = vmatpush.msra.mxu0 %v1909
    %1921 = vmatpush.msra.mxu0 %v1908
    %1922 = vmatpush.msra.mxu0 %v1907
    %1923 = vmatpush.msra.mxu0 %v1906
    %1924 = vmatpush.msra.mxu0 %v1905
    %1925 = vmatpush.msra.mxu0 %v1904
    %1926 = vmatpush.msra.mxu0 %v1903
    %1927 = vmatpush.msra.mxu0 %v1902
    %1928 = vmatpush.msra.mxu0 %v1901
    %1929 = vmatpush.msra.mxu0 %v1900
    %1930 = vmatpush.msra.mxu0 %v1899
    %1931 = vmatmul.f32.gmra.mxu0 %v1860
    %v1932 = vpop.f32.mrf.mxu0
    %v1933 = vadd.f32 0.0, %v1932
    %1934 = vmatmul.f32.gmra.mxu0 %v1862
    %v1935 = vpop.f32.mrf.mxu0
    %v1936 = vadd.f32 0.0, %v1935
    %1937 = vmatmul.f32.gmra.mxu0 %v1865
    %v1938 = vpop.f32.mrf.mxu0
    %v1939 = vadd.f32 0.0, %v1938
    %1940 = vmatmul.f32.gmra.mxu0 %v1867
    %v1941 = vpop.f32.mrf.mxu0
    %v1942 = vadd.f32 0.0, %v1941
    %1943 = vmatmul.f32.gmra.mxu0 %v1870
    %v1944 = vpop.f32.mrf.mxu0
    %v1945 = vadd.f32 0.0, %v1944
    %1946 = vmatmul.f32.gmra.mxu0 %v1872
    %v1947 = vpop.f32.mrf.mxu0
    %v1948 = vadd.f32 0.0, %v1947
    %1949 = vmatmul.f32.gmra.mxu0 %v1875
    %v1950 = vpop.f32.mrf.mxu0
    %v1951 = vadd.f32 0.0, %v1950
    %1952 = vmatmul.f32.gmra.mxu0 %v1877
    %v1953 = vpop.f32.mrf.mxu0
    %v1954 = vadd.f32 0.0, %v1953
    %1955 = vmatmul.f32.gmra.mxu0 %v1880
    %v1956 = vpop.f32.mrf.mxu0
    %v1957 = vadd.f32 0.0, %v1956
    %1958 = vmatmul.f32.gmra.mxu0 %v1882
    %v1959 = vpop.f32.mrf.mxu0
    %v1960 = vadd.f32 0.0, %v1959
    %1961 = vmatmul.f32.gmra.mxu0 %v1885
    %v1962 = vpop.f32.mrf.mxu0
    %v1963 = vadd.f32 0.0, %v1962
    %1964 = vmatmul.f32.gmra.mxu0 %v1887
    %v1965 = vpop.f32.mrf.mxu0
    %v1966 = vadd.f32 0.0, %v1965
    %1967 = vmatmul.f32.gmra.mxu0 %v1890
    %v1968 = vpop.f32.mrf.mxu0
    %v1969 = vadd.f32 0.0, %v1968
    %1970 = vmatmul.f32.gmra.mxu0 %v1892
    %v1971 = vpop.f32.mrf.mxu0
    %v1972 = vadd.f32 0.0, %v1971
    %1973 = vmatmul.f32.gmra.mxu0 %v1895
    %v1974 = vpop.f32.mrf.mxu0
    %v1975 = vadd.f32 0.0, %v1974
    %1976 = vmatmul.f32.gmra.mxu0 %v1897
    %v1977 = vpop.f32.mrf.mxu0
    %v1978 = vadd.f32 0.0, %v1977
    %1979 = vdwg.mxu0
    %v1980 = vsub.f32 %v1735, %v1933
    %v1981 = vsub.f32 %v1737, %v1936
    %v1982 = vsub.f32 %v1740, %v1939
    %v1983 = vsub.f32 %v1742, %v1942
    %v1984 = vsub.f32 %v1745, %v1945
    %v1985 = vsub.f32 %v1747, %v1948
    %v1986 = vsub.f32 %v1750, %v1951
    %v1987 = vsub.f32 %v1752, %v1954
    %v1988 = vsub.f32 %v1755, %v1957
    %v1989 = vsub.f32 %v1757, %v1960
    %v1990 = vsub.f32 %v1760, %v1963
    %v1991 = vsub.f32 %v1762, %v1966
    %v1992 = vsub.f32 %v1765, %v1969
    %v1993 = vsub.f32 %v1767, %v1972
    %v1994 = vsub.f32 %v1770, %v1975
    %v1995 = vsub.f32 %v1772, %v1978
    %v1996 = vld [vmem:[#allocation10] sm:$0xff]
    %vm1997 = vcmask 64512
    %v1999 = vsel %vm1997, %v1980, 0
    %v2002 = vsel %vm1997, %v1981, 0
    %v2005 = vsel %vm1997, %v1982, 0
    %v2008 = vsel %vm1997, %v1983, 0
    %v2011 = vsel %vm1997, %v1984, 0
    %v2014 = vsel %vm1997, %v1985, 0
    %v2017 = vsel %vm1997, %v1986, 0
    %v2020 = vsel %vm1997, %v1987, 0
    %v2023 = vsel %vm1997, %v1988, 0
    %v2026 = vsel %vm1997, %v1989, 0
    %v2029 = vsel %vm1997, %v1990, 0
    %v2032 = vsel %vm1997, %v1991, 0
    %v2035 = vsel %vm1997, %v1992, 0
    %v2038 = vsel %vm1997, %v1993, 0
    %v2041 = vsel %vm1997, %v1994, 0
    %v2044 = vsel %vm1997, %v1995, 0
    %2046 = vmatpush.msra.mxu0 0.0
    %2047 = vmatpush.msra.mxu0 0.0
    %2048 = vmatpush.msra.mxu0 0.0
    %2049 = vmatpush.msra.mxu0 0.0
    %2050 = vmatpush.msra.mxu0 0.0
    %2051 = vmatpush.msra.mxu0 0.0
    %2052 = vmatpush.msra.mxu0 0.0
    %2053 = vmatpush.msra.mxu0 0.0
    %2054 = vmatpush.msra.mxu0 0.0
    %2055 = vmatpush.msra.mxu0 0.0
    %2056 = vmatpush.msra.mxu0 0.0
    %2057 = vmatpush.msra.mxu0 0.0
    %2058 = vmatpush.msra.mxu0 0.0
    %2059 = vmatpush.msra.mxu0 0.0
    %2060 = vmatpush.msra.mxu0 0.0
    %2061 = vmatpush.msra.mxu0 %v1996
    %2062 = vmatmul.f32.gmra.mxu0 %v1999
    %v2063 = vpop.f32.mrf.mxu0
    %v2064 = vadd.f32 0.0, %v2063
    %2065 = vmatmul.f32.gmra.mxu0 %v2002
    %v2066 = vpop.f32.mrf.mxu0
    %v2067 = vadd.f32 0.0, %v2066
    %2068 = vmatmul.f32.gmra.mxu0 %v2005
    %v2069 = vpop.f32.mrf.mxu0
    %v2070 = vadd.f32 0.0, %v2069
    %2071 = vmatmul.f32.gmra.mxu0 %v2008
    %v2072 = vpop.f32.mrf.mxu0
    %v2073 = vadd.f32 0.0, %v2072
    %2074 = vmatmul.f32.gmra.mxu0 %v2011
    %v2075 = vpop.f32.mrf.mxu0
    %v2076 = vadd.f32 0.0, %v2075
    %2077 = vmatmul.f32.gmra.mxu0 %v2014
    %v2078 = vpop.f32.mrf.mxu0
    %v2079 = vadd.f32 0.0, %v2078
    %2080 = vmatmul.f32.gmra.mxu0 %v2017
    %v2081 = vpop.f32.mrf.mxu0
    %v2082 = vadd.f32 0.0, %v2081
    %2083 = vmatmul.f32.gmra.mxu0 %v2020
    %v2084 = vpop.f32.mrf.mxu0
    %v2085 = vadd.f32 0.0, %v2084
    %2086 = vmatmul.f32.gmra.mxu0 %v2023
    %v2087 = vpop.f32.mrf.mxu0
    %v2088 = vadd.f32 0.0, %v2087
    %2089 = vmatmul.f32.gmra.mxu0 %v2026
    %v2090 = vpop.f32.mrf.mxu0
    %v2091 = vadd.f32 0.0, %v2090
    %2092 = vmatmul.f32.gmra.mxu0 %v2029
    %v2093 = vpop.f32.mrf.mxu0
    %v2094 = vadd.f32 0.0, %v2093
    %2095 = vmatmul.f32.gmra.mxu0 %v2032
    %v2096 = vpop.f32.mrf.mxu0
    %v2097 = vadd.f32 0.0, %v2096
    %2098 = vmatmul.f32.gmra.mxu0 %v2035
    %v2099 = vpop.f32.mrf.mxu0
    %v2100 = vadd.f32 0.0, %v2099
    %2101 = vmatmul.f32.gmra.mxu0 %v2038
    %v2102 = vpop.f32.mrf.mxu0
    %v2103 = vadd.f32 0.0, %v2102
    %2104 = vmatmul.f32.gmra.mxu0 %v2041
    %v2105 = vpop.f32.mrf.mxu0
    %v2106 = vadd.f32 0.0, %v2105
    %2107 = vmatmul.f32.gmra.mxu0 %v2044
    %v2108 = vpop.f32.mrf.mxu0
    %v2109 = vadd.f32 0.0, %v2108
    %2110 = vdwg.mxu0
    %v2111 = vadd.f32 %v1860, %v2064
    %v2112 = vadd.f32 %v1862, %v2067
    %v2113 = vadd.f32 %v1865, %v2070
    %v2114 = vadd.f32 %v1867, %v2073
    %v2115 = vadd.f32 %v1870, %v2076
    %v2116 = vadd.f32 %v1872, %v2079
    %v2117 = vadd.f32 %v1875, %v2082
    %v2118 = vadd.f32 %v1877, %v2085
    %v2119 = vadd.f32 %v1880, %v2088
    %v2120 = vadd.f32 %v1882, %v2091
    %v2121 = vadd.f32 %v1885, %v2094
    %v2122 = vadd.f32 %v1887, %v2097
    %v2123 = vadd.f32 %v1890, %v2100
    %v2124 = vadd.f32 %v1892, %v2103
    %v2125 = vadd.f32 %v1895, %v2106
    %v2126 = vadd.f32 %v1897, %v2109
    %2127 = vst [vmem:[#allocation11] sm:$0xff] %v2111
    %2128 = vst [vmem:[#allocation11 + $0x8] sm:$0xff] %v2112
    %2129 = vst [vmem:[#allocation11 + $0x10] sm:$0xff] %v2113
    %2130 = vst [vmem:[#allocation11 + $0x18] sm:$0xff] %v2114
    %2131 = vst [vmem:[#allocation11 + $0x20] sm:$0xff] %v2115
    %2132 = vst [vmem:[#allocation11 + $0x28] sm:$0xff] %v2116
    %2133 = vst [vmem:[#allocation11 + $0x30] sm:$0xff] %v2117
    %2134 = vst [vmem:[#allocation11 + $0x38] sm:$0xff] %v2118
    %2135 = vst [vmem:[#allocation11 + $0x40] sm:$0xff] %v2119
    %2136 = vst [vmem:[#allocation11 + $0x48] sm:$0xff] %v2120
    %2137 = vst [vmem:[#allocation11 + $0x50] sm:$0xff] %v2121
    %2138 = vst [vmem:[#allocation11 + $0x58] sm:$0xff] %v2122
    %2139 = vst [vmem:[#allocation11 + $0x60] sm:$0xff] %v2123
    %2140 = vst [vmem:[#allocation11 + $0x68] sm:$0xff] %v2124
    %2141 = vst [vmem:[#allocation11 + $0x70] sm:$0xff] %v2125
    %2142 = vst [vmem:[#allocation11 + $0x78] sm:$0xff] %v2126
    // Predicated region
    $region82: #{tpu_custom_call.1} parent=1 // pred_check
      _
    $region83: #{tpu_custom_call.1} parent=1 // pred_check_branch
      %2144 = sbr.rel (0) target = $region85
    $region84: #{tpu_custom_call.1} parent=1 // pred_region
      %2146 = vsyncadd [#allocation4], 0
      %s2147 = sshll.u32 [#allocation11], 4
      %s2148 = int_to_ptr.vmem [resolvable:$true] %s2147
      %s2149 = sshll.u32 %s15, 4
      %s2150 = int_to_ptr.hbm [resolvable:$true] %s2149
      %2155 = dma.vmem_to_hbm [thread:$0]  %s2148, 2048, %s2150, [#allocation4], 128, 128, 8
    $region85: #{tpu_custom_call.1} parent=1 // pred_fallthru
      _
    // Predicated region
    $region86: #{tpu_custom_call.1} parent=1 // pred_check
      _
    $region87: #{tpu_custom_call.1} parent=1 // pred_check_branch
      %2157 = sbr.rel (0) target = $region89
    $region88: #{tpu_custom_call.1} parent=1 // pred_region
      %2159 = dma.done [#allocation4], 2048
    $region89: #{tpu_custom_call.1} parent=1 // pred_fallthru
      _
    %2160 = vsyncpa [#allocation3], 1
    %2161 = vsyncpa [#allocation6], 1
    %2162 = vsyncpa [#allocation9], 1
    %2163 = vsyncpa [#allocation4], 1

</llo_original>
